<compile_context>
chip_gen: v7x
topology: tpu7x:2x2x1
jax: 0.10.0
libtpu: 0.0.40
codegen_flags: <defaults>
</compile_context>

<pallas_src>
import math

import numpy as np

import jax
import jax.numpy as jnp
from jax import lax
from jax.experimental import pallas as pl
from jax.experimental.pallas import tpu as pltpu


# ----------------------------------------------------------------------------
# Host-side: fold a 3x3 HWIO conv weight into a block-structured matrix so the
# conv becomes one lane-dense matmul:  (M, 3*W*C) @ (3*W*C, W*C) -> (M, W*C).
#   lhs[y, dy*W*C + x_in*C + ci] = inp(y + dy - 1, x_in, ci)   (0 if y OOB)
#   blk[dy*W*C + x_in*C + ci, x*C + co] = w[dy, x_in - x + 1, ci, co]
# The x-boundary ('same' padding) is handled by the zeros of blk.
# ----------------------------------------------------------------------------
def build_block_weight(w_hwio, W):
    w = np.asarray(w_hwio, np.float32)          # (3, 3, Cin, Cout)
    _, _, Ci, Co = w.shape
    seg = W * Ci
    blk = np.zeros((3 * seg, W * Co), np.float32)
    for dy in range(3):
        for dx in range(3):
            for x in range(W):
                x_in = x + dx - 1
                if 0 <= x_in < W:
                    r = dy * seg + x_in * Ci
                    c = x * Co
                    blk[r:r + Ci, c:c + Co] = w[dy, dx]
    return blk


def prepare_kernel_params(params, H, W):
    """Fold BN scale into weights and pre-tile everything lane-dense (…, W*C)."""
    C = params["w1"].shape[2]
    S = params["wsq"].shape[1]
    WC = W * C

    def tile_c(v):                              # index x*C + c -> v[c]
        return jnp.tile(jnp.asarray(v, jnp.float32), W).reshape(1, WC)

    def folded_block_weight(w_hwio, scale):
        blk = build_block_weight(w_hwio, W)                          # f32
        blk = blk * np.tile(np.asarray(scale, np.float32), W)[None, :]
        return jnp.asarray(blk, jnp.bfloat16)

    inv_hw = 1.0 / float(H * W)
    return dict(
        wblk1=folded_block_weight(params["w1"], params["scale1"]),
        bias1=tile_c(params["bias1"]),
        wblk2=folded_block_weight(params["w2"], params["scale2"]),
        bias2=tile_c(params["bias2"]),
        # global-avg-pool (sum over x and the 1/(H*W)) folded into squeeze W
        wsq=jnp.tile(jnp.asarray(params["wsq"], jnp.float32), (W, 1)) * inv_hw,
        bsq=jnp.asarray(params["bsq"], jnp.float32).reshape(1, S),
        # excite weights pre-expanded to produce lane-dense gamma/beta slabs
        wex=jnp.concatenate([jnp.tile(params["wex"][:, :C], (1, W)),
                             jnp.tile(params["wex"][:, C:], (1, W))], axis=1),
        bex=jnp.concatenate([jnp.tile(params["bex"][:C], W),
                             jnp.tile(params["bex"][C:], W)]).reshape(1, 2 * WC),
    )


def _choose_bblk(B, H, target_rows=256):
    """Images per grid step: raise matmul M toward MXU rows, but keep the
    grid a multiple of 2 so both v7x TensorCores get work."""
    best = 1
    for bb in range(1, B + 1):
        if B % bb:
            continue
        if bb * H > target_rows:
            continue
        if B >= 2 and (B // bb) < 2:
            continue
        best = bb
    return best


# ----------------------------------------------------------------------------
# Fused kernel: one grid step = Bblk batch elements, all activations
# lane-dense (Bblk*H, W*C) in registers, never touching HBM between stages.
# ----------------------------------------------------------------------------
def _make_fused_kernel(Bblk, H, W, C):
    WC = W * C
    M = Bblk * H

    def kernel(x_ref, wb1_ref, b1_ref, wb2_ref, b2_ref,
               wsq_ref, bsq_ref, wex_ref, bex_ref, o_ref):
        x = x_ref[...]                                          # (M, WC) f32

        # Per-image y-halo masks (computed once, shared by both convs).
        # Rolls wrap circularly across stacked images, but the wrapped rows
        # are exactly the masked halo rows, so images never leak.
        row = lax.broadcasted_iota(jnp.int32, (M, 1), 0) % H
        top = row == 0
        bot = row == H - 1

        def conv3x3(a, wb_ref, bias):
            up = jnp.where(top, 0.0, pltpu.roll(a, shift=1, axis=0))      # a[y-1]
            dn = jnp.where(bot, 0.0, pltpu.roll(a, shift=M - 1, axis=0))  # a[y+1]
            lhs = jnp.concatenate([up, a, dn], axis=1).astype(jnp.bfloat16)
            y = jnp.dot(lhs, wb_ref[...], preferred_element_type=jnp.float32)
            return y + bias                     # BN scale folded into weight

        out1 = jnp.maximum(conv3x3(x, wb1_ref, b1_ref[...]), 0.0)
        out2 = conv3x3(out1, wb2_ref, b2_ref[...])

        # SE block: GAP (1/(H*W) folded into wsq) -> squeeze+ReLU -> excite.
        pooled = jnp.sum(out2.reshape(Bblk, H, WC), axis=1)     # (Bblk, WC)
        hidden = jnp.dot(pooled, wsq_ref[...],
                         preferred_element_type=jnp.float32) + bsq_ref[...]
        hidden = jnp.maximum(hidden, 0.0)                       # (Bblk, S)
        se = jnp.dot(hidden, wex_ref[...],
                     preferred_element_type=jnp.float32) + bex_ref[...]
        gate = jax.nn.sigmoid(se[:, :WC])[:, None, :]           # (Bblk, 1, WC)
        beta = se[:, WC:][:, None, :]

        res = gate * out2.reshape(Bblk, H, WC) + beta + x.reshape(Bblk, H, WC)
        o_ref[...] = jnp.maximum(res, 0.0).reshape(M, WC).astype(o_ref.dtype)

    return kernel


# ----------------------------------------------------------------------------
# ResBlock forward (NHWC in / NHWC out; one boundary transpose happens once
# at the network edge, not per block)
# ----------------------------------------------------------------------------
def res_block_forward(x_nhwc, kp):
    B, H, W, C = x_nhwc.shape
    WC = W * C
    # TODO(synk): generalize to H % 8 != 0 or W*C % 128 != 0 (needs padding).
    assert H % 8 == 0 and WC % 128 == 0, (H, WC)

    Bblk = _choose_bblk(B, H)
    grid = B // Bblk
    M = Bblk * H
    S = kp["wsq"].shape[1]

    x2 = x_nhwc.reshape(B * H, WC)      # metadata-only reshape in HBM
    kernel = _make_fused_kernel(Bblk, H, W, C)

    flops = B * (2 * (2 * H * (3 * WC) * WC)        # two conv matmuls
                 + 2 * WC * S + 2 * S * 2 * WC      # SE matmuls
                 + 12 * H * WC)                     # elementwise
    bytes_accessed = 2 * x2.size * 4 + sum(
        int(v.size) * v.dtype.itemsize for v in kp.values())
    cost = pl.CostEstimate(flops=int(flops), transcendentals=int(B * (WC + S)),
                           bytes_accessed=int(bytes_accessed))

    # VMEM budget sanity: the two bf16 block weights (3*(W*C)^2 each) dominate.
    # TODO(synk): K-tile wblk1/wblk2 via a grid axis over 3*W*C once W*C grows
    # (v7x has only 64 MiB physical VMEM / 32 MiB default scoped limit).
    wblk_bytes = 2 * int(kp["wblk1"].size) * 2
    act_bytes = 4 * M * WC * 4          # double-buffered f32 x/out blocks
    assert wblk_bytes + act_bytes < 12 * 1024 * 1024, (wblk_bytes, act_bytes)

    def whole(arr):                     # params: full array, fixed index
        return pl.BlockSpec(arr.shape, lambda i: (0, 0))

    out = pl.pallas_call(
        kernel,
        out_shape=jax.ShapeDtypeStruct((B * H, WC), jnp.float32),
        grid=(grid,),
        in_specs=[
            pl.BlockSpec((M, WC), lambda i: (i, 0)),       # Bblk images / step
            whole(kp["wblk1"]), whole(kp["bias1"]),
            whole(kp["wblk2"]), whole(kp["bias2"]),
            whole(kp["wsq"]), whole(kp["bsq"]),
            whole(kp["wex"]), whole(kp["bex"]),
        ],
        out_specs=pl.BlockSpec((M, WC), lambda i: (i, 0)),
        compiler_params=pltpu.CompilerParams(
            dimension_semantics=("parallel",)),            # 2 TCs on v7x
        cost_estimate=cost,
    )(x2, kp["wblk1"], kp["bias1"], kp["wblk2"], kp["bias2"],
      kp["wsq"], kp["bsq"], kp["wex"], kp["bex"])
    return out.reshape(B, H, W, C)


# ----------------------------------------------------------------------------
# Pure-JAX reference with the same precision policy (BN scale folded into the
# bf16 conv weight, f32 accumulation, inference-mode BN) for verification.
# ----------------------------------------------------------------------------
def res_block_reference(x_nhwc, params):
    def conv_bn(inp, w, scale, bias, relu):
        w_folded = (w * scale.reshape(1, 1, 1, -1)).astype(jnp.bfloat16)
        y = lax.conv_general_dilated(
            inp.astype(jnp.bfloat16), w_folded,
            window_strides=(1, 1), padding="SAME",
            dimension_numbers=("NHWC", "HWIO", "NHWC"),
            preferred_element_type=jnp.float32)
        y = y + bias.reshape(1, 1, 1, -1)
        return jnp.maximum(y, 0.0) if relu else y

    out = conv_bn(x_nhwc, params["w1"], params["scale1"], params["bias1"], True)
    out = conv_bn(out, params["w2"], params["scale2"], params["bias2"], False)
    pooled = jnp.mean(out, axis=(1, 2))
    hidden = jnp.maximum(pooled @ params["wsq"] + params["bsq"], 0.0)
    se = hidden @ params["wex"] + params["bex"]
    C = x_nhwc.shape[-1]
    gammas, betas = se[:, :C], se[:, C:]
    res = jax.nn.sigmoid(gammas)[:, None, None, :] * out \
        + betas[:, None, None, :] + x_nhwc
    return jnp.maximum(res, 0.0)


# ----------------------------------------------------------------------------
# Deterministic parameter construction (shapes from ResBlock.__init__)
# ----------------------------------------------------------------------------
def make_params(key, C, S):
    ks = jax.random.split(key, 16)
    kw_std = math.sqrt(2.0 / (C * 3 * 3))   # kaiming_normal_, fan_out, relu

    def folded_bn(kg, kb, km, kv, kcb):
        gamma = 1.0 + 0.1 * jax.random.normal(kg, (C,), jnp.float32)
        beta = 0.1 * jax.random.normal(kb, (C,), jnp.float32)
        mean = 0.1 * jax.random.normal(km, (C,), jnp.float32)
        var = 0.5 + jax.random.uniform(kv, (C,), jnp.float32)
        conv_b = 0.1 * jax.random.normal(kcb, (C,), jnp.float32)
        scale = gamma / jnp.sqrt(var + 1e-5)
        bias = beta + (conv_b - mean) * scale
        return scale, bias

    w1 = kw_std * jax.random.normal(ks[0], (3, 3, C, C), jnp.float32)
    scale1, bias1 = folded_bn(ks[1], ks[2], ks[3], ks[4], ks[5])
    w2 = kw_std * jax.random.normal(ks[6], (3, 3, C, C), jnp.float32)
    scale2, bias2 = folded_bn(ks[7], ks[8], ks[9], ks[10], ks[11])

    lim_sq = 1.0 / math.sqrt(C)
    lim_ex = 1.0 / math.sqrt(S)
    wsq = jax.random.uniform(ks[12], (C, S), jnp.float32, -lim_sq, lim_sq)
    bsq = jax.random.uniform(ks[13], (S,), jnp.float32, -lim_sq, lim_sq)
    wex = jax.random.uniform(ks[14], (S, 2 * C), jnp.float32, -lim_ex, lim_ex)
    bex = jax.random.uniform(ks[15], (2 * C,), jnp.float32, -lim_ex, lim_ex)

    return dict(w1=w1, scale1=scale1, bias1=bias1,
                w2=w2, scale2=scale2, bias2=bias2,
                wsq=wsq, bsq=bsq, wex=wex, bex=bex)


if __name__ == "__main__":
    B, C, H, W = 2, 16, 16, 16
    SE_SIZE = 8

    key = jax.random.PRNGKey(0)
    kx, kparam = jax.random.split(key)
    # PyTorch-style NCHW input; one boundary transpose to the TPU-friendly
    # NHWC layout (in a full NHWC network this happens once, not per block).
    x_nchw = jax.random.normal(kx, (B, C, H, W), jnp.float32)
    x_nhwc = jnp.transpose(x_nchw, (0, 2, 3, 1))

    params = make_params(kparam, C, SE_SIZE)
    kparams = prepare_kernel_params(params, H, W)

    fwd = jax.jit(res_block_forward)
    out = jax.block_until_ready(fwd(x_nhwc, kparams))

    ref = res_block_reference(x_nhwc, params)
    assert out.shape == (B, H, W, C), out.shape
    max_err = float(jnp.max(jnp.abs(out - ref)))
    assert jnp.allclose(out, ref, rtol=2e-2, atol=2e-2), max_err

    print("KERNEL_OK")
</pallas_src>

<mosaic_0001>
module attributes {stable_mosaic.version = 11 : i64} {
  func.func @kernel(%arg0: i32, %arg1: memref<16x256xf32, #tpu.memory_space<vmem>>, %arg2: memref<768x256xbf16, #tpu.memory_space<vmem>>, %arg3: memref<1x256xf32, #tpu.memory_space<vmem>>, %arg4: memref<768x256xbf16, #tpu.memory_space<vmem>>, %arg5: memref<1x256xf32, #tpu.memory_space<vmem>>, %arg6: memref<256x8xf32, #tpu.memory_space<vmem>>, %arg7: memref<1x8xf32, #tpu.memory_space<vmem>>, %arg8: memref<8x512xf32, #tpu.memory_space<vmem>>, %arg9: memref<1x512xf32, #tpu.memory_space<vmem>>, %arg10: memref<16x256xf32, #tpu.memory_space<vmem>>) attributes {dimension_semantics = [#tpu.dimension_semantics<parallel>], iteration_bounds = array<i64: 2>, scalar_prefetch = 0 : i64, scratch_operands = 0 : i64, tpu.core_type = #tpu.core_type<tc>, window_params = [{transform_indices = @transform_0, window_bounds = array<i64: 16, 256>}, {pipeline_mode = #tpu.pipeline_mode<synchronous>, transform_indices = @transform_1, window_bounds = array<i64: 768, 256>}, {pipeline_mode = #tpu.pipeline_mode<synchronous>, transform_indices = @transform_2, window_bounds = array<i64: 1, 256>}, {pipeline_mode = #tpu.pipeline_mode<synchronous>, transform_indices = @transform_3, window_bounds = array<i64: 768, 256>}, {pipeline_mode = #tpu.pipeline_mode<synchronous>, transform_indices = @transform_4, window_bounds = array<i64: 1, 256>}, {pipeline_mode = #tpu.pipeline_mode<synchronous>, transform_indices = @transform_5, window_bounds = array<i64: 256, 8>}, {pipeline_mode = #tpu.pipeline_mode<synchronous>, transform_indices = @transform_6, window_bounds = array<i64: 1, 8>}, {pipeline_mode = #tpu.pipeline_mode<synchronous>, transform_indices = @transform_7, window_bounds = array<i64: 8, 512>}, {pipeline_mode = #tpu.pipeline_mode<synchronous>, transform_indices = @transform_8, window_bounds = array<i64: 1, 512>}, {transform_indices = @transform_9, window_bounds = array<i64: 16, 256>}]} {
    %c0 = arith.constant 0 : index
    %c0_0 = arith.constant 0 : index
    %0 = vector.load %arg1[%c0, %c0_0] : memref<16x256xf32, #tpu.memory_space<vmem>>, vector<16x256xf32>
    %1 = tpu.iota {dimensions = array<i32: 0>} : vector<16x1xi32>
    %c16_i32 = arith.constant 16 : i32
    %c0_i32 = arith.constant 0 : i32
    %2 = arith.cmpi eq, %c16_i32, %c0_i32 : i32
    %c1_i32 = arith.constant 1 : i32
    %3 = arith.select %2, %c1_i32, %c16_i32 : i32
    %4 = vector.broadcast %3 : i32 to vector<16x1xi32>
    %5 = arith.remsi %1, %4 : vector<16x1xi32>
    %c0_i32_1 = arith.constant 0 : i32
    %6 = vector.broadcast %c0_i32_1 : i32 to vector<16x1xi32>
    %7 = arith.cmpi ne, %5, %6 : vector<16x1xi32>
    %c0_i32_2 = arith.constant 0 : i32
    %8 = vector.broadcast %c0_i32_2 : i32 to vector<16x1xi32>
    %9 = arith.cmpi slt, %5, %8 : vector<16x1xi32>
    %c0_i32_3 = arith.constant 0 : i32
    %10 = arith.cmpi slt, %3, %c0_i32_3 : i32
    %11 = vector.broadcast %10 : i1 to vector<16x1xi1>
    %12 = vector.broadcast %11 : vector<16x1xi1> to vector<16x1xi1>
    %13 = arith.xori %9, %12 : vector<16x1xi1>
    %14 = arith.andi %13, %7 : vector<16x1xi1>
    %15 = vector.broadcast %3 : i32 to vector<16x1xi32>
    %16 = arith.addi %5, %15 : vector<16x1xi32>
    %17 = arith.select %14, %16, %5 : vector<16x1xi1>, vector<16x1xi32>
    %c0_i32_4 = arith.constant 0 : i32
    %18 = vector.broadcast %c0_i32_4 : i32 to vector<16x1xi32>
    %19 = arith.cmpi eq, %17, %18 : vector<16x1xi32>
    %c15_i32 = arith.constant 15 : i32
    %20 = vector.broadcast %c15_i32 : i32 to vector<16x1xi32>
    %21 = arith.cmpi eq, %17, %20 : vector<16x1xi32>
    %c0_5 = arith.constant 0 : index
    %c0_6 = arith.constant 0 : index
    %22 = vector.load %arg3[%c0_5, %c0_6] : memref<1x256xf32, #tpu.memory_space<vmem>>, vector<1x256xf32>
    %c1_i32_7 = arith.constant 1 : i32
    %23 = tpu.dynamic_rotate %0 by %c1_i32_7 dim 0 : vector<16x256xf32>, i32 -> vector<16x256xf32>
    %cst = arith.constant 0.000000e+00 : f32
    %24 = vector.shape_cast %19 : vector<16x1xi1> to vector<16x1xi1>
    %25 = vector.broadcast %24 : vector<16x1xi1> to vector<16x256xi1>
    %26 = vector.broadcast %cst : f32 to vector<16x256xf32>
    %27 = arith.select %25, %26, %23 : vector<16x256xi1>, vector<16x256xf32>
    %c15_i32_8 = arith.constant 15 : i32
    %28 = tpu.dynamic_rotate %0 by %c15_i32_8 dim 0 : vector<16x256xf32>, i32 -> vector<16x256xf32>
    %cst_9 = arith.constant 0.000000e+00 : f32
    %29 = vector.shape_cast %21 : vector<16x1xi1> to vector<16x1xi1>
    %30 = vector.broadcast %29 : vector<16x1xi1> to vector<16x256xi1>
    %31 = vector.broadcast %cst_9 : f32 to vector<16x256xf32>
    %32 = arith.select %30, %31, %28 : vector<16x256xi1>, vector<16x256xf32>
    %33 = tpu.concatenate %27, %0, %32 in 1 : vector<16x256xf32>, vector<16x256xf32>, vector<16x256xf32> -> vector<16x768xf32>
    %34 = arith.truncf %33 : vector<16x768xf32> to vector<16x768xbf16>
    %c0_10 = arith.constant 0 : index
    %c0_11 = arith.constant 0 : index
    %35 = vector.load %arg2[%c0_10, %c0_11] : memref<768x256xbf16, #tpu.memory_space<vmem>>, vector<768x256xbf16>
    %cst_12 = arith.constant dense<0.000000e+00> : vector<16x256xf32>
    %36 = tpu.matmul %34, %35, %cst_12 {dimension_numbers = #tpu.dot_dimension_numbers<[1], [0], [0], [1], [0, 0, 1, 1], [], []>} : vector<16x768xbf16>, vector<768x256xbf16>, vector<16x256xf32> -> vector<16x256xf32>
    %37 = vector.broadcast %22 : vector<1x256xf32> to vector<16x256xf32>
    %38 = arith.addf %36, %37 : vector<16x256xf32>
    %cst_13 = arith.constant 0.000000e+00 : f32
    %39 = vector.broadcast %cst_13 : f32 to vector<16x256xf32>
    %40 = arith.maximumf %38, %39 : vector<16x256xf32>
    %c0_14 = arith.constant 0 : index
    %c0_15 = arith.constant 0 : index
    %41 = vector.load %arg5[%c0_14, %c0_15] : memref<1x256xf32, #tpu.memory_space<vmem>>, vector<1x256xf32>
    %c1_i32_16 = arith.constant 1 : i32
    %42 = tpu.dynamic_rotate %40 by %c1_i32_16 dim 0 : vector<16x256xf32>, i32 -> vector<16x256xf32>
    %cst_17 = arith.constant 0.000000e+00 : f32
    %43 = vector.shape_cast %19 : vector<16x1xi1> to vector<16x1xi1>
    %44 = vector.broadcast %43 : vector<16x1xi1> to vector<16x256xi1>
    %45 = vector.broadcast %cst_17 : f32 to vector<16x256xf32>
    %46 = arith.select %44, %45, %42 : vector<16x256xi1>, vector<16x256xf32>
    %c15_i32_18 = arith.constant 15 : i32
    %47 = tpu.dynamic_rotate %40 by %c15_i32_18 dim 0 : vector<16x256xf32>, i32 -> vector<16x256xf32>
    %cst_19 = arith.constant 0.000000e+00 : f32
    %48 = vector.shape_cast %21 : vector<16x1xi1> to vector<16x1xi1>
    %49 = vector.broadcast %48 : vector<16x1xi1> to vector<16x256xi1>
    %50 = vector.broadcast %cst_19 : f32 to vector<16x256xf32>
    %51 = arith.select %49, %50, %47 : vector<16x256xi1>, vector<16x256xf32>
    %52 = tpu.concatenate %46, %40, %51 in 1 : vector<16x256xf32>, vector<16x256xf32>, vector<16x256xf32> -> vector<16x768xf32>
    %53 = arith.truncf %52 : vector<16x768xf32> to vector<16x768xbf16>
    %c0_20 = arith.constant 0 : index
    %c0_21 = arith.constant 0 : index
    %54 = vector.load %arg4[%c0_20, %c0_21] : memref<768x256xbf16, #tpu.memory_space<vmem>>, vector<768x256xbf16>
    %cst_22 = arith.constant dense<0.000000e+00> : vector<16x256xf32>
    %55 = tpu.matmul %53, %54, %cst_22 {dimension_numbers = #tpu.dot_dimension_numbers<[1], [0], [0], [1], [0, 0, 1, 1], [], []>} : vector<16x768xbf16>, vector<768x256xbf16>, vector<16x256xf32> -> vector<16x256xf32>
    %56 = vector.broadcast %41 : vector<1x256xf32> to vector<16x256xf32>
    %57 = arith.addf %55, %56 : vector<16x256xf32>
    %58 = vector.shape_cast %57 : vector<16x256xf32> to vector<1x16x256xf32>
    %cst_23 = arith.constant dense<0.000000e+00> : vector<1x256xf32>
    %59 = vector.multi_reduction <add>, %58, %cst_23 [1] : vector<1x16x256xf32> to vector<1x256xf32>
    %c0_24 = arith.constant 0 : index
    %c0_25 = arith.constant 0 : index
    %60 = vector.load %arg6[%c0_24, %c0_25] : memref<256x8xf32, #tpu.memory_space<vmem>>, vector<256x8xf32>
    %cst_26 = arith.constant dense<0.000000e+00> : vector<1x8xf32>
    %61 = tpu.matmul %59, %60, %cst_26 {dimension_numbers = #tpu.dot_dimension_numbers<[1], [0], [0], [1], [0, 0, 1, 1], [], []>} : vector<1x256xf32>, vector<256x8xf32>, vector<1x8xf32> -> vector<1x8xf32>
    %c0_27 = arith.constant 0 : index
    %c0_28 = arith.constant 0 : index
    %62 = vector.load %arg7[%c0_27, %c0_28] : memref<1x8xf32, #tpu.memory_space<vmem>>, vector<1x8xf32>
    %63 = arith.addf %61, %62 : vector<1x8xf32>
    %cst_29 = arith.constant 0.000000e+00 : f32
    %64 = vector.broadcast %cst_29 : f32 to vector<1x8xf32>
    %65 = arith.maximumf %63, %64 : vector<1x8xf32>
    %c0_30 = arith.constant 0 : index
    %c0_31 = arith.constant 0 : index
    %66 = vector.load %arg8[%c0_30, %c0_31] : memref<8x512xf32, #tpu.memory_space<vmem>>, vector<8x512xf32>
    %cst_32 = arith.constant dense<0.000000e+00> : vector<1x512xf32>
    %67 = tpu.matmul %65, %66, %cst_32 {dimension_numbers = #tpu.dot_dimension_numbers<[1], [0], [0], [1], [0, 0, 1, 1], [], []>} : vector<1x8xf32>, vector<8x512xf32>, vector<1x512xf32> -> vector<1x512xf32>
    %c0_33 = arith.constant 0 : index
    %c0_34 = arith.constant 0 : index
    %68 = vector.load %arg9[%c0_33, %c0_34] : memref<1x512xf32, #tpu.memory_space<vmem>>, vector<1x512xf32>
    %69 = arith.addf %67, %68 : vector<1x512xf32>
    %70 = vector.extract_strided_slice %69 {offsets = [0, 0], sizes = [1, 256], strides = [1, 1]} : vector<1x512xf32> to vector<1x256xf32>
    %71 = arith.negf %70 : vector<1x256xf32>
    %72 = math.exp %71 : vector<1x256xf32>
    %cst_35 = arith.constant 1.000000e+00 : f32
    %73 = vector.broadcast %cst_35 : f32 to vector<1x256xf32>
    %74 = arith.addf %73, %72 : vector<1x256xf32>
    %75 = arith.divf %73, %74 : vector<1x256xf32>
    %76 = vector.shape_cast %75 : vector<1x256xf32> to vector<1x1x256xf32>
    %77 = vector.extract_strided_slice %69 {offsets = [0, 256], sizes = [1, 256], strides = [1, 1]} : vector<1x512xf32> to vector<1x256xf32>
    %78 = vector.shape_cast %77 : vector<1x256xf32> to vector<1x1x256xf32>
    %79 = vector.shape_cast %57 : vector<16x256xf32> to vector<1x16x256xf32>
    %80 = vector.broadcast %76 : vector<1x1x256xf32> to vector<1x16x256xf32>
    %81 = arith.mulf %80, %79 : vector<1x16x256xf32>
    %82 = vector.broadcast %78 : vector<1x1x256xf32> to vector<1x16x256xf32>
    %83 = arith.addf %81, %82 : vector<1x16x256xf32>
    %84 = vector.shape_cast %0 : vector<16x256xf32> to vector<1x16x256xf32>
    %85 = arith.addf %83, %84 : vector<1x16x256xf32>
    %cst_36 = arith.constant 0.000000e+00 : f32
    %86 = vector.broadcast %cst_36 : f32 to vector<1x16x256xf32>
    %87 = arith.maximumf %85, %86 : vector<1x16x256xf32>
    %88 = vector.shape_cast %87 : vector<1x16x256xf32> to vector<16x256xf32>
    %c0_37 = arith.constant 0 : index
    %c0_38 = arith.constant 0 : index
    %89 = vector.load %arg10[%c0_37, %c0_38] : memref<16x256xf32, #tpu.memory_space<vmem>>, vector<16x256xf32>
    tpu.vector_store %arg10[%c0_37, %c0_38], %88 {strides = array<i32>} : memref<16x256xf32, #tpu.memory_space<vmem>>, vector<16x256xf32>,
    return
  }
  func.func @transform_0(%arg0: i32) -> (i32, i32) {
    %c0_i32 = arith.constant 0 : i32
    %c0_i32_0 = arith.constant 0 : i32
    return %arg0, %c0_i32 : i32, i32
  }
  func.func @transform_1(%arg0: i32) -> (i32, i32) {
    %c0_i32 = arith.constant 0 : i32
    %c0_i32_0 = arith.constant 0 : i32
    %c0_i32_1 = arith.constant 0 : i32
    return %c0_i32, %c0_i32_0 : i32, i32
  }
  func.func @transform_2(%arg0: i32) -> (i32, i32) {
    %c0_i32 = arith.constant 0 : i32
    %c0_i32_0 = arith.constant 0 : i32
    %c0_i32_1 = arith.constant 0 : i32
    return %c0_i32, %c0_i32_0 : i32, i32
  }
  func.func @transform_3(%arg0: i32) -> (i32, i32) {
    %c0_i32 = arith.constant 0 : i32
    %c0_i32_0 = arith.constant 0 : i32
    %c0_i32_1 = arith.constant 0 : i32
    return %c0_i32, %c0_i32_0 : i32, i32
  }
  func.func @transform_4(%arg0: i32) -> (i32, i32) {
    %c0_i32 = arith.constant 0 : i32
    %c0_i32_0 = arith.constant 0 : i32
    %c0_i32_1 = arith.constant 0 : i32
    return %c0_i32, %c0_i32_0 : i32, i32
  }
  func.func @transform_5(%arg0: i32) -> (i32, i32) {
    %c0_i32 = arith.constant 0 : i32
    %c0_i32_0 = arith.constant 0 : i32
    %c0_i32_1 = arith.constant 0 : i32
    return %c0_i32, %c0_i32_0 : i32, i32
  }
  func.func @transform_6(%arg0: i32) -> (i32, i32) {
    %c0_i32 = arith.constant 0 : i32
    %c0_i32_0 = arith.constant 0 : i32
    %c0_i32_1 = arith.constant 0 : i32
    return %c0_i32, %c0_i32_0 : i32, i32
  }
  func.func @transform_7(%arg0: i32) -> (i32, i32) {
    %c0_i32 = arith.constant 0 : i32
    %c0_i32_0 = arith.constant 0 : i32
    %c0_i32_1 = arith.constant 0 : i32
    return %c0_i32, %c0_i32_0 : i32, i32
  }
  func.func @transform_8(%arg0: i32) -> (i32, i32) {
    %c0_i32 = arith.constant 0 : i32
    %c0_i32_0 = arith.constant 0 : i32
    %c0_i32_1 = arith.constant 0 : i32
    return %c0_i32, %c0_i32_0 : i32, i32
  }
  func.func @transform_9(%arg0: i32) -> (i32, i32) {
    %c0_i32 = arith.constant 0 : i32
    %c0_i32_0 = arith.constant 0 : i32
    return %arg0, %c0_i32 : i32, i32
  }
}

</mosaic_0001>

<llo_original>
// kernel: res_block_forward.1
$region0: #{res_block_forward.1}
  #allocation0 [shape = 'u32[]', space=smem, size = 0x4, offset = 0x4, fixed_abs, tag = 'smem constant byte address 0x4 - core index']
  #allocation1 [shape = 'u32[144,128]{1,0:T(1,128)}', space=vmem, size = 0x12000, scoped, tag = 'internal scratch']
  %s0 = inlined_call_operand.vmem [shape: f32[32,256], index: 0, kind: input, shape index: {}]
  %s1 = inlined_call_operand.vmem [shape: bf16[768,256], index: 1, kind: input, shape index: {}]
  %s2 = inlined_call_operand.vmem [shape: f32[1,256], index: 2, kind: input, shape index: {}]
  %s3 = inlined_call_operand.hbm [shape: bf16[768,256], index: 3, kind: input, shape index: {}]
  %s4 = inlined_call_operand.vmem [shape: f32[1,256], index: 4, kind: input, shape index: {}]
  %s5 = inlined_call_operand.vmem [shape: f32[256,8], index: 5, kind: input, shape index: {}]
  %s6 = inlined_call_operand.vmem [shape: f32[1,8], index: 6, kind: input, shape index: {}]
  %s7 = inlined_call_operand.vmem [shape: f32[8,512], index: 7, kind: input, shape index: {}]
  %s8 = inlined_call_operand.vmem [shape: f32[1,512], index: 8, kind: input, shape index: {}]
  %s9 = inlined_call_operand.vmem [shape: f32[32,256], index: 9, kind: output, shape index: {}]
  %s10 = sld [smem:[#allocation0]]
  $region73: #{res_block_forward.1} parent=0
    _
  %s12 = ssub.s32 1, %s10
  %s13 = scalar_select 0, %s12, %s10
  $region1: #{res_block_forward.1} parent=0
    #allocation2 [shape = 'u8[393216]{0}', space=vmem, size = 0x60000, scoped, tag = 'input window, operand 3, single buffered']
    #allocation3 [shape = 's32[2]{0}', space=sflag, size = 0x8, scoped, tag = 'scoped memory for res_block_forward.1']
    %14 = vsyncpa [#allocation3], 0
    loop: start=0, step=1, limit=4
    $region2: #{res_block_forward.1} parent=1 // loop_pre_header
      _
    $region3: #{res_block_forward.1} parent=1 // loop_header
      %s16 = sphi 0, %s20
      %p17 = scmp.ge.s32.totalorder %s16, 4
      %s26 = sphi 0, %s28
      %s29 = sphi 0, %s26
      %s30 = sphi 0, %s29
      %s46 = sphi 0, %s30
      %s50 = sphi 0, %s50
      %s52 = sphi 0, %s50
      %s53 = sphi 0, %s52
      %s67 = sphi 0, %s53
      %s71 = sphi 0, %s71
      %s73 = sphi 0, %s71
      %s74 = sphi 0, %s73
      %s88 = sphi 0, %s74
      %s92 = sphi 0, %s92
      %s94 = sphi 0, %s92
      %s95 = sphi 0, %s94
      %s109 = sphi 0, %s95
      %s113 = sphi 0, %s113
      %s115 = sphi 0, %s113
      %s116 = sphi 0, %s115
      %s130 = sphi 0, %s116
      %s134 = sphi 0, %s134
      %s136 = sphi 0, %s134
      %s137 = sphi 0, %s136
      %s151 = sphi 0, %s137
      %s155 = sphi 0, %s155
      %s157 = sphi 0, %s155
      %s158 = sphi 0, %s157
      %s172 = sphi 0, %s158
      %s176 = sphi 0, %s176
      %s178 = sphi 0, %s176
      %s179 = sphi 0, %s178
      %s193 = sphi 0, %s179
      %s197 = sphi 0, %s197
      %s199 = sphi 0, %s197
      %s200 = sphi 0, %s199
      %s214 = sphi 0, %s200
      %s220 = sphi 0, %s222
      %s223 = sphi 0, %s220
      %s224 = sphi 0, %s223
      %s240 = sphi 0, %s224
    $region4: #{res_block_forward.1} parent=1 // loop_header_branch
      %19 = sbr.rel (%p17) target = $region8
    $region5: #{res_block_forward.1} parent=1 // loop_body
      %s21 = ssub.s32 %s16, 1
      %s22 = ssub.s32 %s16, 2
      %s23 = sadd.s32 %s16, 1
      %s24 = ssub.s32 %s16, %s23
      %p25 = scmp.eq.s32.totalorder %s24, 0
      %s27 = sadd.s32 %s26, 1
      %s28 = scalar_select %p25, %s26, %s27
      %p31 = pneg %p25
      %p32 = scmp.eq.s32.totalorder %s16, 1
      %p33 = por %p31, %p32
      %p34 = scmp.ne.s32.totalorder %s26, %s29
      %p35 = scmp.eq.s32.totalorder %s16, 0
      %p36 = por %p34, %p35
      %p37 = scmp.ne.s32.totalorder %s26, %s29
      %p38 = scmp.eq.s32.totalorder %s21, 1
      %p39 = por %p37, %p38
      %p40 = scmp.ne.s32.totalorder %s29, %s30
      %p41 = scmp.eq.s32.totalorder %s21, 0
      %p42 = por %p40, %p41
      %p43 = scmp.ne.s32.totalorder %s29, %s30
      %p44 = scmp.eq.s32.totalorder %s22, 1
      %p45 = por %p43, %p44
      %p47 = scmp.ne.s32.totalorder %s30, %s46
      %p48 = scmp.eq.s32.totalorder %s22, 0
      %p49 = por %p47, %p48
      %s51 = sadd.s32 %s50, 1
      %p54 = scmp.eq.s32.totalorder %s16, 1
      %p55 = scmp.ne.s32.totalorder %s50, %s52
      %p56 = scmp.eq.s32.totalorder %s16, 0
      %p57 = por %p55, %p56
      %p58 = scmp.ne.s32.totalorder %s50, %s52
      %p59 = scmp.eq.s32.totalorder %s21, 1
      %p60 = por %p58, %p59
      %p61 = scmp.ne.s32.totalorder %s52, %s53
      %p62 = scmp.eq.s32.totalorder %s21, 0
      %p63 = por %p61, %p62
      %p64 = scmp.ne.s32.totalorder %s52, %s53
      %p65 = scmp.eq.s32.totalorder %s22, 1
      %p66 = por %p64, %p65
      %p68 = scmp.ne.s32.totalorder %s53, %s67
      %p69 = scmp.eq.s32.totalorder %s22, 0
      %p70 = por %p68, %p69
      %s72 = sadd.s32 %s71, 1
      %p75 = scmp.eq.s32.totalorder %s16, 1
      %p76 = scmp.ne.s32.totalorder %s71, %s73
      %p77 = scmp.eq.s32.totalorder %s16, 0
      %p78 = por %p76, %p77
      %p79 = scmp.ne.s32.totalorder %s71, %s73
      %p80 = scmp.eq.s32.totalorder %s21, 1
      %p81 = por %p79, %p80
      %p82 = scmp.ne.s32.totalorder %s73, %s74
      %p83 = scmp.eq.s32.totalorder %s21, 0
      %p84 = por %p82, %p83
      %p85 = scmp.ne.s32.totalorder %s73, %s74
      %p86 = scmp.eq.s32.totalorder %s22, 1
      %p87 = por %p85, %p86
      %p89 = scmp.ne.s32.totalorder %s74, %s88
      %p90 = scmp.eq.s32.totalorder %s22, 0
      %p91 = por %p89, %p90
      %s93 = sadd.s32 %s92, 1
      %p96 = scmp.eq.s32.totalorder %s16, 1
      %p97 = scmp.ne.s32.totalorder %s92, %s94
      %p98 = scmp.eq.s32.totalorder %s16, 0
      %p99 = por %p97, %p98
      %p100 = scmp.ne.s32.totalorder %s92, %s94
      %p101 = scmp.eq.s32.totalorder %s21, 1
      %p102 = por %p100, %p101
      %p103 = scmp.ne.s32.totalorder %s94, %s95
      %p104 = scmp.eq.s32.totalorder %s21, 0
      %p105 = por %p103, %p104
      %p106 = scmp.ne.s32.totalorder %s94, %s95
      %p107 = scmp.eq.s32.totalorder %s22, 1
      %p108 = por %p106, %p107
      %p110 = scmp.ne.s32.totalorder %s95, %s109
      %p111 = scmp.eq.s32.totalorder %s22, 0
      %p112 = por %p110, %p111
      %s114 = sadd.s32 %s113, 1
      %p117 = scmp.eq.s32.totalorder %s16, 1
      %p118 = scmp.ne.s32.totalorder %s113, %s115
      %p119 = scmp.eq.s32.totalorder %s16, 0
      %p120 = por %p118, %p119
      %p121 = scmp.ne.s32.totalorder %s113, %s115
      %p122 = scmp.eq.s32.totalorder %s21, 1
      %p123 = por %p121, %p122
      %p124 = scmp.ne.s32.totalorder %s115, %s116
      %p125 = scmp.eq.s32.totalorder %s21, 0
      %p126 = por %p124, %p125
      %p127 = scmp.ne.s32.totalorder %s115, %s116
      %p128 = scmp.eq.s32.totalorder %s22, 1
      %p129 = por %p127, %p128
      %p131 = scmp.ne.s32.totalorder %s116, %s130
      %p132 = scmp.eq.s32.totalorder %s22, 0
      %p133 = por %p131, %p132
      %s135 = sadd.s32 %s134, 1
      %p138 = scmp.eq.s32.totalorder %s16, 1
      %p139 = scmp.ne.s32.totalorder %s134, %s136
      %p140 = scmp.eq.s32.totalorder %s16, 0
      %p141 = por %p139, %p140
      %p142 = scmp.ne.s32.totalorder %s134, %s136
      %p143 = scmp.eq.s32.totalorder %s21, 1
      %p144 = por %p142, %p143
      %p145 = scmp.ne.s32.totalorder %s136, %s137
      %p146 = scmp.eq.s32.totalorder %s21, 0
      %p147 = por %p145, %p146
      %p148 = scmp.ne.s32.totalorder %s136, %s137
      %p149 = scmp.eq.s32.totalorder %s22, 1
      %p150 = por %p148, %p149
      %p152 = scmp.ne.s32.totalorder %s137, %s151
      %p153 = scmp.eq.s32.totalorder %s22, 0
      %p154 = por %p152, %p153
      %s156 = sadd.s32 %s155, 1
      %p159 = scmp.eq.s32.totalorder %s16, 1
      %p160 = scmp.ne.s32.totalorder %s155, %s157
      %p161 = scmp.eq.s32.totalorder %s16, 0
      %p162 = por %p160, %p161
      %p163 = scmp.ne.s32.totalorder %s155, %s157
      %p164 = scmp.eq.s32.totalorder %s21, 1
      %p165 = por %p163, %p164
      %p166 = scmp.ne.s32.totalorder %s157, %s158
      %p167 = scmp.eq.s32.totalorder %s21, 0
      %p168 = por %p166, %p167
      %p169 = scmp.ne.s32.totalorder %s157, %s158
      %p170 = scmp.eq.s32.totalorder %s22, 1
      %p171 = por %p169, %p170
      %p173 = scmp.ne.s32.totalorder %s158, %s172
      %p174 = scmp.eq.s32.totalorder %s22, 0
      %p175 = por %p173, %p174
      %s177 = sadd.s32 %s176, 1
      %p180 = scmp.eq.s32.totalorder %s16, 1
      %p181 = scmp.ne.s32.totalorder %s176, %s178
      %p182 = scmp.eq.s32.totalorder %s16, 0
      %p183 = por %p181, %p182
      %p184 = scmp.ne.s32.totalorder %s176, %s178
      %p185 = scmp.eq.s32.totalorder %s21, 1
      %p186 = por %p184, %p185
      %p187 = scmp.ne.s32.totalorder %s178, %s179
      %p188 = scmp.eq.s32.totalorder %s21, 0
      %p189 = por %p187, %p188
      %p190 = scmp.ne.s32.totalorder %s178, %s179
      %p191 = scmp.eq.s32.totalorder %s22, 1
      %p192 = por %p190, %p191
      %p194 = scmp.ne.s32.totalorder %s179, %s193
      %p195 = scmp.eq.s32.totalorder %s22, 0
      %p196 = por %p194, %p195
      %s198 = sadd.s32 %s197, 1
      %p201 = scmp.eq.s32.totalorder %s16, 1
      %p202 = scmp.ne.s32.totalorder %s197, %s199
      %p203 = scmp.eq.s32.totalorder %s16, 0
      %p204 = por %p202, %p203
      %p205 = scmp.ne.s32.totalorder %s197, %s199
      %p206 = scmp.eq.s32.totalorder %s21, 1
      %p207 = por %p205, %p206
      %p208 = scmp.ne.s32.totalorder %s199, %s200
      %p209 = scmp.eq.s32.totalorder %s21, 0
      %p210 = por %p208, %p209
      %p211 = scmp.ne.s32.totalorder %s199, %s200
      %p212 = scmp.eq.s32.totalorder %s22, 1
      %p213 = por %p211, %p212
      %p215 = scmp.ne.s32.totalorder %s200, %s214
      %p216 = scmp.eq.s32.totalorder %s22, 0
      %p217 = por %p215, %p216
      %s218 = ssub.s32 %s16, %s23
      %p219 = scmp.eq.s32.totalorder %s218, 0
      %s221 = sadd.s32 %s220, 1
      %s222 = scalar_select %p219, %s220, %s221
      %p225 = pneg %p219
      %p226 = scmp.eq.s32.totalorder %s16, 1
      %p227 = por %p225, %p226
      %p228 = scmp.ne.s32.totalorder %s220, %s223
      %p229 = scmp.eq.s32.totalorder %s16, 0
      %p230 = por %p228, %p229
      %p231 = scmp.ne.s32.totalorder %s220, %s223
      %p232 = scmp.eq.s32.totalorder %s21, 1
      %p233 = por %p231, %p232
      %p234 = scmp.ne.s32.totalorder %s223, %s224
      %p235 = scmp.eq.s32.totalorder %s21, 0
      %p236 = por %p234, %p235
      %p237 = scmp.ne.s32.totalorder %s223, %s224
      %p238 = scmp.eq.s32.totalorder %s22, 1
      %p239 = por %p237, %p238
      %p241 = scmp.ne.s32.totalorder %s224, %s240
      %p242 = scmp.eq.s32.totalorder %s22, 0
      %p243 = por %p241, %p242
      %p244 = scmp.le.s32.totalorder 1, %s16
      %p245 = scmp.lt.s32.totalorder %s16, 3
      %p246 = pnand %p244, %p245
      %p247 = pneg %p246
      // Predicated region
      $region9: #{res_block_forward.1} parent=5 // pred_check
        _
      $region10: #{res_block_forward.1} parent=5 // pred_check_branch
        %249 = sbr.rel (%p246) target = $region12
      $region11: #{res_block_forward.1} parent=5 // pred_region
        %s250 = ssub.s32 %s16, 1
        // Predicated region
        $region13: #{res_block_forward.1} parent=11 // pred_check
          %p251 = pneg %p63
        $region14: #{res_block_forward.1} parent=11 // pred_check_branch
          %253 = sbr.rel (%p251) target = $region16
        $region15: #{res_block_forward.1} parent=11 // pred_region
          _
        $region16: #{res_block_forward.1} parent=11 // pred_fallthru
          _
        // Predicated region
        $region17: #{res_block_forward.1} parent=11 // pred_check
          %p254 = pneg %p84
        $region18: #{res_block_forward.1} parent=11 // pred_check_branch
          %256 = sbr.rel (%p254) target = $region20
        $region19: #{res_block_forward.1} parent=11 // pred_region
          _
        $region20: #{res_block_forward.1} parent=11 // pred_fallthru
          _
        // Predicated region
        $region21: #{res_block_forward.1} parent=11 // pred_check
          %p257 = pneg %p105
        $region22: #{res_block_forward.1} parent=11 // pred_check_branch
          %259 = sbr.rel (%p257) target = $region24
        $region23: #{res_block_forward.1} parent=11 // pred_region
          %s261 = ssub.s32 12288, 12288
          %262 = vsyncadd [#allocation3], %s261
          %s263 = sshll.u32 [#allocation2], 4
          %s264 = int_to_ptr.vmem [resolvable:$true] %s263
          %269 = dma.hbm_to_vmem [thread:$0]  %s3, 12288, %s264, [#allocation3], 128, 128, 8
        $region24: #{res_block_forward.1} parent=11 // pred_fallthru
          _
        // Predicated region
        $region25: #{res_block_forward.1} parent=11 // pred_check
          %p270 = pneg %p126
        $region26: #{res_block_forward.1} parent=11 // pred_check_branch
          %272 = sbr.rel (%p270) target = $region28
        $region27: #{res_block_forward.1} parent=11 // pred_region
          _
        $region28: #{res_block_forward.1} parent=11 // pred_fallthru
          _
        // Predicated region
        $region29: #{res_block_forward.1} parent=11 // pred_check
          %p273 = pneg %p147
        $region30: #{res_block_forward.1} parent=11 // pred_check_branch
          %275 = sbr.rel (%p273) target = $region32
        $region31: #{res_block_forward.1} parent=11 // pred_region
          _
        $region32: #{res_block_forward.1} parent=11 // pred_fallthru
          _
        // Predicated region
        $region33: #{res_block_forward.1} parent=11 // pred_check
          %p276 = pneg %p168
        $region34: #{res_block_forward.1} parent=11 // pred_check_branch
          %278 = sbr.rel (%p276) target = $region36
        $region35: #{res_block_forward.1} parent=11 // pred_region
          _
        $region36: #{res_block_forward.1} parent=11 // pred_fallthru
          _
        // Predicated region
        $region37: #{res_block_forward.1} parent=11 // pred_check
          %p279 = pneg %p189
        $region38: #{res_block_forward.1} parent=11 // pred_check_branch
          %281 = sbr.rel (%p279) target = $region40
        $region39: #{res_block_forward.1} parent=11 // pred_region
          _
        $region40: #{res_block_forward.1} parent=11 // pred_fallthru
          _
        // Predicated region
        $region41: #{res_block_forward.1} parent=11 // pred_check
          %p282 = pneg %p210
        $region42: #{res_block_forward.1} parent=11 // pred_check_branch
          %284 = sbr.rel (%p282) target = $region44
        $region43: #{res_block_forward.1} parent=11 // pred_region
          _
        $region44: #{res_block_forward.1} parent=11 // pred_fallthru
          _
      $region12: #{res_block_forward.1} parent=5 // pred_fallthru
        _
      %p285 = scmp.lt.s32.totalorder %s16, 2
      // Predicated region
      $region45: #{res_block_forward.1} parent=5 // pred_check
        %p286 = pneg %p285
      $region46: #{res_block_forward.1} parent=5 // pred_check_branch
        %288 = sbr.rel (%p286) target = $region48
      $region47: #{res_block_forward.1} parent=5 // pred_region
        // Predicated region
        $region49: #{res_block_forward.1} parent=47 // pred_check
          %p289 = pneg %p36
        $region50: #{res_block_forward.1} parent=47 // pred_check_branch
          %291 = sbr.rel (%p289) target = $region52
        $region51: #{res_block_forward.1} parent=47 // pred_region
          %s292 = smul.u32 2, %s16
          %p293 = scmp.lt.s32.totalorder %s292, 3
          %s294 = scalar_select %p293, %s292, 3
          %s295 = smul.addr %s294, 2
          %s296 = smul.addr %s295, 8
          %s297 = scalar_lea.vmem %s0, %s296
          %s298 = smul.u32 2, %s16
        $region52: #{res_block_forward.1} parent=47 // pred_fallthru
          _
      $region48: #{res_block_forward.1} parent=5 // pred_fallthru
        _
      %p299 = scmp.le.s32.totalorder 1, %s16
      %p300 = scmp.lt.s32.totalorder %s16, 3
      %p301 = pnand %p299, %p300
      %p302 = pneg %p301
      // Predicated region
      $region53: #{res_block_forward.1} parent=5 // pred_check
        _
      $region54: #{res_block_forward.1} parent=5 // pred_check_branch
        %304 = sbr.rel (%p301) target = $region56
      $region55: #{res_block_forward.1} parent=5 // pred_region
        %s305 = ssub.s32 %s16, 1
        // Predicated region
        $region57: #{res_block_forward.1} parent=55 // pred_check
          %p306 = pneg %p105
        $region58: #{res_block_forward.1} parent=55 // pred_check_branch
          %308 = sbr.rel (%p306) target = $region60
        $region59: #{res_block_forward.1} parent=55 // pred_region
          %309 = dma.done [#allocation3], 12288
        $region60: #{res_block_forward.1} parent=55 // pred_fallthru
          _
        %s310 = smul.u32 2, %s21
        %p311 = scmp.lt.s32.totalorder %s310, 3
        %s312 = scalar_select %p311, %s310, 3
        %s313 = smul.addr %s312, 2
        %s314 = smul.addr %s313, 8
        %s315 = scalar_lea.vmem %s0, %s314
        %p316 = pneg %p42
        %p317 = pneg %p39
        %p318 = pneg %p63
        %p319 = pneg %p60
        %p320 = pneg %p84
        %p321 = pneg %p81
        %p322 = pneg %p105
        %p323 = pneg %p102
        %p324 = pneg %p126
        %p325 = pneg %p123
        %p326 = pneg %p147
        %p327 = pneg %p144
        %p328 = pneg %p168
        %p329 = pneg %p165
        %p330 = pneg %p189
        %p331 = pneg %p186
        %p332 = pneg %p210
        %p333 = pneg %p207
        %p334 = pneg %p236
        %p335 = pneg %p233
        %s336 = smul.u32 2, %s21
        %p337 = scmp.lt.s32.totalorder %s336, 3
        %s338 = scalar_select %p337, %s336, 3
        %s339 = smul.addr %s338, 2
        %s340 = smul.addr %s339, 8
        %s341 = scalar_lea.vmem %s9, %s340
        %s342 = smul.u32 2, %s21
        %p343 = scmp.lt.s32.totalorder %s342, 3
        %s344 = scalar_select %p343, %s342, 3
        %s345 = smul.addr %s344, 2
        %s346 = smul.addr %s345, 8
        %s347 = scalar_lea.vmem %s0, %s346
        %s348 = smul.u32 2, %s21
        %s349 = smul.u32 2, %s21
        %p350 = scmp.lt.s32.totalorder %s349, 3
        %s351 = scalar_select %p350, %s349, 3
        %s352 = smul.addr %s351, 2
        %s353 = smul.addr %s352, 8
        %s354 = scalar_lea.vmem %s9, %s353
        %s355 = smul.u32 2, %s21
        %v356 = vld [vmem:[%s347] sm:$0xff]
        %v357 = vld [vmem:[%s347 + $0x8] sm:$0xff]
        %v358 = vld [vmem:[%s347 + $0x10] sm:$0xff]
        %v359 = vld [vmem:[%s347 + $0x18] sm:$0xff]
        %v360 = vlaneseq
        %v361 = vshrl.u32 %v360, 7
        %v362 = vadd.s32 %v361, 8
        %vm363 = vcmp.lt.s32.totalorder %v361, 0
        %v364 = vsub.s32 0, %v361
        %v365 = vsel %vm363, %v364, %v361
        %v366 = vshrl.u32 %v365, 4
        %v367 = vand.u32 %v365, 15
        %v368 = vsub.s32 0, %v367
        %v369 = vsel %vm363, %v368, %v367
        %vm370 = vcmp.lt.s32.totalorder %v362, 0
        %v371 = vsub.s32 0, %v362
        %v372 = vsel %vm370, %v371, %v362
        %v373 = vshrl.u32 %v372, 4
        %v374 = vand.u32 %v372, 15
        %v375 = vsub.s32 0, %v374
        %v376 = vsel %vm370, %v375, %v374
        %vm377 = vcmp.ne.s32.totalorder %v369, 0
        %vm378 = vcmp.ne.s32.totalorder %v376, 0
        %vm379 = vcmp.lt.s32.totalorder %v369, 0
        %vm380 = vcmp.lt.s32.totalorder %v376, 0
        %vm381 = vmand %vm379, %vm377
        %vm382 = vmand %vm380, %vm378
        %v383 = vadd.s32 %v369, 16
        %v384 = vadd.s32 %v376, 16
        %v385 = vsel %vm381, %v383, %v369
        %v386 = vsel %vm382, %v384, %v376
        %vm387 = vcmp.eq.s32.totalorder %v385, 0
        %vm388 = vcmp.eq.s32.totalorder %v386, 0
        %vm389 = vcmp.eq.s32.totalorder %v385, 15
        %vm390 = vcmp.eq.s32.totalorder %v386, 15
        %v391 = vld [vmem:[%s2] sm:$0x3]
        %v392 = vrot.slane %v356, 7
        %v393 = vrot.slane %v357, 7
        %v394 = vrot.slane %v358, 7
        %v395 = vrot.slane %v359, 7
        %vm396 = vcmp.lt.s32.totalorder %v361, 1
        %v397 = vsel %vm396, %v392, %v394
        %v398 = vsel %vm396, %v393, %v395
        %v399 = vsel %vm396, %v394, %v392
        %v400 = vsel %vm396, %v395, %v393
        %v401 = vsel %vm387, 1, 0
        %v402 = vsel %vm388, 1, 0
        %vm403 = vcmp.eq.s32.totalorder %v401, 1
        %vm404 = vcmp.eq.s32.totalorder %v402, 1
        %v405 = vsel %vm403, 0.0, %v399
        %v406 = vsel %vm403, 0.0, %v400
        %v407 = vsel %vm404, 0.0, %v397
        %v408 = vsel %vm404, 0.0, %v398
        %v409 = vrot.slane %v356, 1
        %v410 = vrot.slane %v357, 1
        %v411 = vrot.slane %v358, 1
        %v412 = vrot.slane %v359, 1
        %vm413 = vcmp.lt.s32.totalorder %v361, 7
        %v414 = vsel %vm413, %v409, %v411
        %v415 = vsel %vm413, %v410, %v412
        %v416 = vsel %vm413, %v411, %v409
        %v417 = vsel %vm413, %v412, %v410
        %v418 = vsel %vm389, 1, 0
        %v419 = vsel %vm390, 1, 0
        %vm420 = vcmp.eq.s32.totalorder %v418, 1
        %vm421 = vcmp.eq.s32.totalorder %v419, 1
        %v422 = vsel %vm420, 0.0, %v414
        %v423 = vsel %vm420, 0.0, %v415
        %v424 = vsel %vm421, 0.0, %v416
        %v425 = vsel %vm421, 0.0, %v417
        %v426 = vpack.c.bf16 %v407, %v405
        %v427 = vpack.c.bf16 %v408, %v406
        %v428 = vpack.c.bf16 %v358, %v356
        %v429 = vpack.c.bf16 %v359, %v357
        %v430 = vpack.c.bf16 %v424, %v422
        %v431 = vpack.c.bf16 %v425, %v423
        %v432 = vld [vmem:[%s1] sm:$0xff]
        %v433 = vld [vmem:[%s1 + $0x8] sm:$0xff]
        %v434 = vld [vmem:[%s1 + $0x10] sm:$0xff]
        %v435 = vld [vmem:[%s1 + $0x18] sm:$0xff]
        %v436 = vld [vmem:[%s1 + $0x20] sm:$0xff]
        %v437 = vld [vmem:[%s1 + $0x28] sm:$0xff]
        %v438 = vld [vmem:[%s1 + $0x30] sm:$0xff]
        %v439 = vld [vmem:[%s1 + $0x38] sm:$0xff]
        %v440 = vld [vmem:[%s1 + $0x40] sm:$0xff]
        %v441 = vld [vmem:[%s1 + $0x48] sm:$0xff]
        %v442 = vld [vmem:[%s1 + $0x50] sm:$0xff]
        %v443 = vld [vmem:[%s1 + $0x58] sm:$0xff]
        %v444 = vld [vmem:[%s1 + $0x60] sm:$0xff]
        %v445 = vld [vmem:[%s1 + $0x68] sm:$0xff]
        %v446 = vld [vmem:[%s1 + $0x70] sm:$0xff]
        %v447 = vld [vmem:[%s1 + $0x78] sm:$0xff]
        %v448 = vld [vmem:[%s1 + $0x80] sm:$0xff]
        %v449 = vld [vmem:[%s1 + $0x88] sm:$0xff]
        %v450 = vld [vmem:[%s1 + $0x90] sm:$0xff]
        %v451 = vld [vmem:[%s1 + $0x98] sm:$0xff]
        %v452 = vld [vmem:[%s1 + $0xa0] sm:$0xff]
        %v453 = vld [vmem:[%s1 + $0xa8] sm:$0xff]
        %v454 = vld [vmem:[%s1 + $0xb0] sm:$0xff]
        %v455 = vld [vmem:[%s1 + $0xb8] sm:$0xff]
        %v456 = vld [vmem:[%s1 + $0xc0] sm:$0xff]
        %v457 = vld [vmem:[%s1 + $0xc8] sm:$0xff]
        %v458 = vld [vmem:[%s1 + $0xd0] sm:$0xff]
        %v459 = vld [vmem:[%s1 + $0xd8] sm:$0xff]
        %v460 = vld [vmem:[%s1 + $0xe0] sm:$0xff]
        %v461 = vld [vmem:[%s1 + $0xe8] sm:$0xff]
        %v462 = vld [vmem:[%s1 + $0xf0] sm:$0xff]
        %v463 = vld [vmem:[%s1 + $0xf8] sm:$0xff]
        %v464 = vld [vmem:[%s1 + $0x100] sm:$0xff]
        %v465 = vld [vmem:[%s1 + $0x108] sm:$0xff]
        %v466 = vld [vmem:[%s1 + $0x110] sm:$0xff]
        %v467 = vld [vmem:[%s1 + $0x118] sm:$0xff]
        %v468 = vld [vmem:[%s1 + $0x120] sm:$0xff]
        %v469 = vld [vmem:[%s1 + $0x128] sm:$0xff]
        %v470 = vld [vmem:[%s1 + $0x130] sm:$0xff]
        %v471 = vld [vmem:[%s1 + $0x138] sm:$0xff]
        %v472 = vld [vmem:[%s1 + $0x140] sm:$0xff]
        %v473 = vld [vmem:[%s1 + $0x148] sm:$0xff]
        %v474 = vld [vmem:[%s1 + $0x150] sm:$0xff]
        %v475 = vld [vmem:[%s1 + $0x158] sm:$0xff]
        %v476 = vld [vmem:[%s1 + $0x160] sm:$0xff]
        %v477 = vld [vmem:[%s1 + $0x168] sm:$0xff]
        %v478 = vld [vmem:[%s1 + $0x170] sm:$0xff]
        %v479 = vld [vmem:[%s1 + $0x178] sm:$0xff]
        %v480 = vld [vmem:[%s1 + $0x180] sm:$0xff]
        %v481 = vld [vmem:[%s1 + $0x188] sm:$0xff]
        %v482 = vld [vmem:[%s1 + $0x190] sm:$0xff]
        %v483 = vld [vmem:[%s1 + $0x198] sm:$0xff]
        %v484 = vld [vmem:[%s1 + $0x1a0] sm:$0xff]
        %v485 = vld [vmem:[%s1 + $0x1a8] sm:$0xff]
        %v486 = vld [vmem:[%s1 + $0x1b0] sm:$0xff]
        %v487 = vld [vmem:[%s1 + $0x1b8] sm:$0xff]
        %v488 = vld [vmem:[%s1 + $0x1c0] sm:$0xff]
        %v489 = vld [vmem:[%s1 + $0x1c8] sm:$0xff]
        %v490 = vld [vmem:[%s1 + $0x1d0] sm:$0xff]
        %v491 = vld [vmem:[%s1 + $0x1d8] sm:$0xff]
        %v492 = vld [vmem:[%s1 + $0x1e0] sm:$0xff]
        %v493 = vld [vmem:[%s1 + $0x1e8] sm:$0xff]
        %v494 = vld [vmem:[%s1 + $0x1f0] sm:$0xff]
        %v495 = vld [vmem:[%s1 + $0x1f8] sm:$0xff]
        %v496 = vld [vmem:[%s1 + $0x200] sm:$0xff]
        %v497 = vld [vmem:[%s1 + $0x208] sm:$0xff]
        %v498 = vld [vmem:[%s1 + $0x210] sm:$0xff]
        %v499 = vld [vmem:[%s1 + $0x218] sm:$0xff]
        %v500 = vld [vmem:[%s1 + $0x220] sm:$0xff]
        %v501 = vld [vmem:[%s1 + $0x228] sm:$0xff]
        %v502 = vld [vmem:[%s1 + $0x230] sm:$0xff]
        %v503 = vld [vmem:[%s1 + $0x238] sm:$0xff]
        %v504 = vld [vmem:[%s1 + $0x240] sm:$0xff]
        %v505 = vld [vmem:[%s1 + $0x248] sm:$0xff]
        %v506 = vld [vmem:[%s1 + $0x250] sm:$0xff]
        %v507 = vld [vmem:[%s1 + $0x258] sm:$0xff]
        %v508 = vld [vmem:[%s1 + $0x260] sm:$0xff]
        %v509 = vld [vmem:[%s1 + $0x268] sm:$0xff]
        %v510 = vld [vmem:[%s1 + $0x270] sm:$0xff]
        %v511 = vld [vmem:[%s1 + $0x278] sm:$0xff]
        %v512 = vld [vmem:[%s1 + $0x280] sm:$0xff]
        %v513 = vld [vmem:[%s1 + $0x288] sm:$0xff]
        %v514 = vld [vmem:[%s1 + $0x290] sm:$0xff]
        %v515 = vld [vmem:[%s1 + $0x298] sm:$0xff]
        %v516 = vld [vmem:[%s1 + $0x2a0] sm:$0xff]
        %v517 = vld [vmem:[%s1 + $0x2a8] sm:$0xff]
        %v518 = vld [vmem:[%s1 + $0x2b0] sm:$0xff]
        %v519 = vld [vmem:[%s1 + $0x2b8] sm:$0xff]
        %v520 = vld [vmem:[%s1 + $0x2c0] sm:$0xff]
        %v521 = vld [vmem:[%s1 + $0x2c8] sm:$0xff]
        %v522 = vld [vmem:[%s1 + $0x2d0] sm:$0xff]
        %v523 = vld [vmem:[%s1 + $0x2d8] sm:$0xff]
        %v524 = vld [vmem:[%s1 + $0x2e0] sm:$0xff]
        %v525 = vld [vmem:[%s1 + $0x2e8] sm:$0xff]
        %v526 = vld [vmem:[%s1 + $0x2f0] sm:$0xff]
        %v527 = vld [vmem:[%s1 + $0x2f8] sm:$0xff]
        %v529 = vlaneseq
        %v530 = vshrl.u32 %v529, 7
        %v531 = vsub.s32 0, %v530
        %v532 = vrot.slane %v391, %v531
        %v533 = vlaneseq
        %v534 = vshrl.u32 %v533, 7
        %v535 = vsub.s32 1, %v534
        %v536 = vrot.slane %v391, %v535
        %v635 = vunpack.c.l.b16 %v432
        %v636 = vunpack.c.h.b16 %v432
        %v637 = vunpack.c.l.b16 %v433
        %v638 = vunpack.c.h.b16 %v433
        %v639 = vunpack.c.l.b16 %v434
        %v640 = vunpack.c.h.b16 %v434
        %v641 = vunpack.c.l.b16 %v435
        %v642 = vunpack.c.h.b16 %v435
        %v643 = vunpack.c.l.b16 %v436
        %v644 = vunpack.c.h.b16 %v436
        %v645 = vunpack.c.l.b16 %v437
        %v646 = vunpack.c.h.b16 %v437
        %v647 = vunpack.c.l.b16 %v438
        %v648 = vunpack.c.h.b16 %v438
        %v649 = vunpack.c.l.b16 %v439
        %v650 = vunpack.c.h.b16 %v439
        %v651 = vunpack.c.l.b16 %v440
        %v652 = vunpack.c.h.b16 %v440
        %v653 = vunpack.c.l.b16 %v441
        %v654 = vunpack.c.h.b16 %v441
        %v655 = vunpack.c.l.b16 %v442
        %v656 = vunpack.c.h.b16 %v442
        %v657 = vunpack.c.l.b16 %v443
        %v658 = vunpack.c.h.b16 %v443
        %v659 = vunpack.c.l.b16 %v444
        %v660 = vunpack.c.h.b16 %v444
        %v661 = vunpack.c.l.b16 %v445
        %v662 = vunpack.c.h.b16 %v445
        %v663 = vunpack.c.l.b16 %v446
        %v664 = vunpack.c.h.b16 %v446
        %v665 = vunpack.c.l.b16 %v447
        %v666 = vunpack.c.h.b16 %v447
        %v667 = vunpack.c.l.b16 %v448
        %v668 = vunpack.c.h.b16 %v448
        %v669 = vunpack.c.l.b16 %v449
        %v670 = vunpack.c.h.b16 %v449
        %v671 = vunpack.c.l.b16 %v450
        %v672 = vunpack.c.h.b16 %v450
        %v673 = vunpack.c.l.b16 %v451
        %v674 = vunpack.c.h.b16 %v451
        %v675 = vunpack.c.l.b16 %v452
        %v676 = vunpack.c.h.b16 %v452
        %v677 = vunpack.c.l.b16 %v453
        %v678 = vunpack.c.h.b16 %v453
        %v679 = vunpack.c.l.b16 %v454
        %v680 = vunpack.c.h.b16 %v454
        %v681 = vunpack.c.l.b16 %v455
        %v682 = vunpack.c.h.b16 %v455
        %v683 = vunpack.c.l.b16 %v456
        %v684 = vunpack.c.h.b16 %v456
        %v685 = vunpack.c.l.b16 %v457
        %v686 = vunpack.c.h.b16 %v457
        %v687 = vunpack.c.l.b16 %v458
        %v688 = vunpack.c.h.b16 %v458
        %v689 = vunpack.c.l.b16 %v459
        %v690 = vunpack.c.h.b16 %v459
        %v691 = vunpack.c.l.b16 %v460
        %v692 = vunpack.c.h.b16 %v460
        %v693 = vunpack.c.l.b16 %v461
        %v694 = vunpack.c.h.b16 %v461
        %v695 = vunpack.c.l.b16 %v462
        %v696 = vunpack.c.h.b16 %v462
        %v697 = vunpack.c.l.b16 %v463
        %v698 = vunpack.c.h.b16 %v463
        %v699 = vunpack.c.l.b16 %v464
        %v700 = vunpack.c.h.b16 %v464
        %v701 = vunpack.c.l.b16 %v465
        %v702 = vunpack.c.h.b16 %v465
        %v703 = vunpack.c.l.b16 %v466
        %v704 = vunpack.c.h.b16 %v466
        %v705 = vunpack.c.l.b16 %v467
        %v706 = vunpack.c.h.b16 %v467
        %v707 = vunpack.c.l.b16 %v468
        %v708 = vunpack.c.h.b16 %v468
        %v709 = vunpack.c.l.b16 %v469
        %v710 = vunpack.c.h.b16 %v469
        %v711 = vunpack.c.l.b16 %v470
        %v712 = vunpack.c.h.b16 %v470
        %v713 = vunpack.c.l.b16 %v471
        %v714 = vunpack.c.h.b16 %v471
        %v715 = vunpack.c.l.b16 %v472
        %v716 = vunpack.c.h.b16 %v472
        %v717 = vunpack.c.l.b16 %v473
        %v718 = vunpack.c.h.b16 %v473
        %v719 = vunpack.c.l.b16 %v474
        %v720 = vunpack.c.h.b16 %v474
        %v721 = vunpack.c.l.b16 %v475
        %v722 = vunpack.c.h.b16 %v475
        %v723 = vunpack.c.l.b16 %v476
        %v724 = vunpack.c.h.b16 %v476
        %v725 = vunpack.c.l.b16 %v477
        %v726 = vunpack.c.h.b16 %v477
        %v727 = vunpack.c.l.b16 %v478
        %v728 = vunpack.c.h.b16 %v478
        %v729 = vunpack.c.l.b16 %v479
        %v730 = vunpack.c.h.b16 %v479
        %v731 = vunpack.c.l.b16 %v480
        %v732 = vunpack.c.h.b16 %v480
        %v733 = vunpack.c.l.b16 %v481
        %v734 = vunpack.c.h.b16 %v481
        %v735 = vunpack.c.l.b16 %v482
        %v736 = vunpack.c.h.b16 %v482
        %v737 = vunpack.c.l.b16 %v483
        %v738 = vunpack.c.h.b16 %v483
        %v739 = vunpack.c.l.b16 %v484
        %v740 = vunpack.c.h.b16 %v484
        %v741 = vunpack.c.l.b16 %v485
        %v742 = vunpack.c.h.b16 %v485
        %v743 = vunpack.c.l.b16 %v486
        %v744 = vunpack.c.h.b16 %v486
        %v745 = vunpack.c.l.b16 %v487
        %v746 = vunpack.c.h.b16 %v487
        %v747 = vunpack.c.l.b16 %v488
        %v748 = vunpack.c.h.b16 %v488
        %v749 = vunpack.c.l.b16 %v489
        %v750 = vunpack.c.h.b16 %v489
        %v751 = vunpack.c.l.b16 %v490
        %v752 = vunpack.c.h.b16 %v490
        %v753 = vunpack.c.l.b16 %v491
        %v754 = vunpack.c.h.b16 %v491
        %v755 = vunpack.c.l.b16 %v492
        %v756 = vunpack.c.h.b16 %v492
        %v757 = vunpack.c.l.b16 %v493
        %v758 = vunpack.c.h.b16 %v493
        %v759 = vunpack.c.l.b16 %v494
        %v760 = vunpack.c.h.b16 %v494
        %v761 = vunpack.c.l.b16 %v495
        %v762 = vunpack.c.h.b16 %v495
        %v763 = vunpack.c.l.b16 %v496
        %v764 = vunpack.c.h.b16 %v496
        %v765 = vunpack.c.l.b16 %v497
        %v766 = vunpack.c.h.b16 %v497
        %v767 = vunpack.c.l.b16 %v498
        %v768 = vunpack.c.h.b16 %v498
        %v769 = vunpack.c.l.b16 %v499
        %v770 = vunpack.c.h.b16 %v499
        %v771 = vunpack.c.l.b16 %v500
        %v772 = vunpack.c.h.b16 %v500
        %v773 = vunpack.c.l.b16 %v501
        %v774 = vunpack.c.h.b16 %v501
        %v775 = vunpack.c.l.b16 %v502
        %v776 = vunpack.c.h.b16 %v502
        %v777 = vunpack.c.l.b16 %v503
        %v778 = vunpack.c.h.b16 %v503
        %v779 = vunpack.c.l.b16 %v504
        %v780 = vunpack.c.h.b16 %v504
        %v781 = vunpack.c.l.b16 %v505
        %v782 = vunpack.c.h.b16 %v505
        %v783 = vunpack.c.l.b16 %v506
        %v784 = vunpack.c.h.b16 %v506
        %v785 = vunpack.c.l.b16 %v507
        %v786 = vunpack.c.h.b16 %v507
        %v787 = vunpack.c.l.b16 %v508
        %v788 = vunpack.c.h.b16 %v508
        %v789 = vunpack.c.l.b16 %v509
        %v790 = vunpack.c.h.b16 %v509
        %v791 = vunpack.c.l.b16 %v510
        %v792 = vunpack.c.h.b16 %v510
        %v793 = vunpack.c.l.b16 %v511
        %v794 = vunpack.c.h.b16 %v511
        %v795 = vunpack.c.l.b16 %v512
        %v796 = vunpack.c.h.b16 %v512
        %v797 = vunpack.c.l.b16 %v513
        %v798 = vunpack.c.h.b16 %v513
        %v799 = vunpack.c.l.b16 %v514
        %v800 = vunpack.c.h.b16 %v514
        %v801 = vunpack.c.l.b16 %v515
        %v802 = vunpack.c.h.b16 %v515
        %v803 = vunpack.c.l.b16 %v516
        %v804 = vunpack.c.h.b16 %v516
        %v805 = vunpack.c.l.b16 %v517
        %v806 = vunpack.c.h.b16 %v517
        %v807 = vunpack.c.l.b16 %v518
        %v808 = vunpack.c.h.b16 %v518
        %v809 = vunpack.c.l.b16 %v519
        %v810 = vunpack.c.h.b16 %v519
        %v811 = vunpack.c.l.b16 %v520
        %v812 = vunpack.c.h.b16 %v520
        %v813 = vunpack.c.l.b16 %v521
        %v814 = vunpack.c.h.b16 %v521
        %v815 = vunpack.c.l.b16 %v522
        %v816 = vunpack.c.h.b16 %v522
        %v817 = vunpack.c.l.b16 %v523
        %v818 = vunpack.c.h.b16 %v523
        %v819 = vunpack.c.l.b16 %v524
        %v820 = vunpack.c.h.b16 %v524
        %v821 = vunpack.c.l.b16 %v525
        %v822 = vunpack.c.h.b16 %v525
        %v823 = vunpack.c.l.b16 %v526
        %v824 = vunpack.c.h.b16 %v526
        %v825 = vunpack.c.l.b16 %v527
        %v826 = vunpack.c.h.b16 %v527
        %v827 = vpack.c.b16 %v637, %v635
        %v828 = vpack.c.b16 %v638, %v636
        %v829 = vpack.c.b16 %v641, %v639
        %v830 = vpack.c.b16 %v642, %v640
        %v831 = vpack.c.b16 %v645, %v643
        %v832 = vpack.c.b16 %v646, %v644
        %v833 = vpack.c.b16 %v649, %v647
        %v834 = vpack.c.b16 %v650, %v648
        %v835 = vpack.c.b16 %v653, %v651
        %v836 = vpack.c.b16 %v654, %v652
        %v837 = vpack.c.b16 %v657, %v655
        %v838 = vpack.c.b16 %v658, %v656
        %v839 = vpack.c.b16 %v661, %v659
        %v840 = vpack.c.b16 %v662, %v660
        %v841 = vpack.c.b16 %v665, %v663
        %v842 = vpack.c.b16 %v666, %v664
        %v843 = vpack.c.b16 %v669, %v667
        %v844 = vpack.c.b16 %v670, %v668
        %v845 = vpack.c.b16 %v673, %v671
        %v846 = vpack.c.b16 %v674, %v672
        %v847 = vpack.c.b16 %v677, %v675
        %v848 = vpack.c.b16 %v678, %v676
        %v849 = vpack.c.b16 %v681, %v679
        %v850 = vpack.c.b16 %v682, %v680
        %v851 = vpack.c.b16 %v685, %v683
        %v852 = vpack.c.b16 %v686, %v684
        %v853 = vpack.c.b16 %v689, %v687
        %v854 = vpack.c.b16 %v690, %v688
        %v855 = vpack.c.b16 %v693, %v691
        %v856 = vpack.c.b16 %v694, %v692
        %v857 = vpack.c.b16 %v697, %v695
        %v858 = vpack.c.b16 %v698, %v696
        %v859 = vpack.c.b16 %v701, %v699
        %v860 = vpack.c.b16 %v702, %v700
        %v861 = vpack.c.b16 %v705, %v703
        %v862 = vpack.c.b16 %v706, %v704
        %v863 = vpack.c.b16 %v709, %v707
        %v864 = vpack.c.b16 %v710, %v708
        %v865 = vpack.c.b16 %v713, %v711
        %v866 = vpack.c.b16 %v714, %v712
        %v867 = vpack.c.b16 %v717, %v715
        %v868 = vpack.c.b16 %v718, %v716
        %v869 = vpack.c.b16 %v721, %v719
        %v870 = vpack.c.b16 %v722, %v720
        %v871 = vpack.c.b16 %v725, %v723
        %v872 = vpack.c.b16 %v726, %v724
        %v873 = vpack.c.b16 %v729, %v727
        %v874 = vpack.c.b16 %v730, %v728
        %v875 = vpack.c.b16 %v733, %v731
        %v876 = vpack.c.b16 %v734, %v732
        %v877 = vpack.c.b16 %v737, %v735
        %v878 = vpack.c.b16 %v738, %v736
        %v879 = vpack.c.b16 %v741, %v739
        %v880 = vpack.c.b16 %v742, %v740
        %v881 = vpack.c.b16 %v745, %v743
        %v882 = vpack.c.b16 %v746, %v744
        %v883 = vpack.c.b16 %v749, %v747
        %v884 = vpack.c.b16 %v750, %v748
        %v885 = vpack.c.b16 %v753, %v751
        %v886 = vpack.c.b16 %v754, %v752
        %v887 = vpack.c.b16 %v757, %v755
        %v888 = vpack.c.b16 %v758, %v756
        %v889 = vpack.c.b16 %v761, %v759
        %v890 = vpack.c.b16 %v762, %v760
        %v891 = vpack.c.b16 %v765, %v763
        %v892 = vpack.c.b16 %v766, %v764
        %v893 = vpack.c.b16 %v769, %v767
        %v894 = vpack.c.b16 %v770, %v768
        %v895 = vpack.c.b16 %v773, %v771
        %v896 = vpack.c.b16 %v774, %v772
        %v897 = vpack.c.b16 %v777, %v775
        %v898 = vpack.c.b16 %v778, %v776
        %v899 = vpack.c.b16 %v781, %v779
        %v900 = vpack.c.b16 %v782, %v780
        %v901 = vpack.c.b16 %v785, %v783
        %v902 = vpack.c.b16 %v786, %v784
        %v903 = vpack.c.b16 %v789, %v787
        %v904 = vpack.c.b16 %v790, %v788
        %v905 = vpack.c.b16 %v793, %v791
        %v906 = vpack.c.b16 %v794, %v792
        %v907 = vpack.c.b16 %v797, %v795
        %v908 = vpack.c.b16 %v798, %v796
        %v909 = vpack.c.b16 %v801, %v799
        %v910 = vpack.c.b16 %v802, %v800
        %v911 = vpack.c.b16 %v805, %v803
        %v912 = vpack.c.b16 %v806, %v804
        %v913 = vpack.c.b16 %v809, %v807
        %v914 = vpack.c.b16 %v810, %v808
        %v915 = vpack.c.b16 %v813, %v811
        %v916 = vpack.c.b16 %v814, %v812
        %v917 = vpack.c.b16 %v817, %v815
        %v918 = vpack.c.b16 %v818, %v816
        %v919 = vpack.c.b16 %v821, %v819
        %v920 = vpack.c.b16 %v822, %v820
        %v921 = vpack.c.b16 %v825, %v823
        %v922 = vpack.c.b16 %v826, %v824
        %1019 = vmatprep.subr.bf16.mxu0 %v828
        %1020 = vmatpush1.bf16.msra.mxu0 %v827
        %1021 = vmatprep.subr.bf16.mxu0 %v830
        %1022 = vmatpush1.bf16.msra.mxu0 %v829
        %1023 = vmatprep.subr.bf16.mxu0 %v832
        %1024 = vmatpush1.bf16.msra.mxu0 %v831
        %1025 = vmatprep.subr.bf16.mxu0 %v834
        %1026 = vmatpush1.bf16.msra.mxu0 %v833
        %1027 = vmatprep.subr.bf16.mxu0 %v836
        %1028 = vmatpush1.bf16.msra.mxu0 %v835
        %1029 = vmatprep.subr.bf16.mxu0 %v838
        %1030 = vmatpush1.bf16.msra.mxu0 %v837
        %1031 = vmatprep.subr.bf16.mxu0 %v840
        %1032 = vmatpush1.bf16.msra.mxu0 %v839
        %1033 = vmatprep.subr.bf16.mxu0 %v842
        %1034 = vmatpush1.bf16.msra.mxu0 %v841
        %1035 = vmatprep.subr.bf16.mxu0 %v844
        %1036 = vmatpush1.bf16.msra.mxu0 %v843
        %1037 = vmatprep.subr.bf16.mxu0 %v846
        %1038 = vmatpush1.bf16.msra.mxu0 %v845
        %1039 = vmatprep.subr.bf16.mxu0 %v848
        %1040 = vmatpush1.bf16.msra.mxu0 %v847
        %1041 = vmatprep.subr.bf16.mxu0 %v850
        %1042 = vmatpush1.bf16.msra.mxu0 %v849
        %1043 = vmatprep.subr.bf16.mxu0 %v852
        %1044 = vmatpush1.bf16.msra.mxu0 %v851
        %1045 = vmatprep.subr.bf16.mxu0 %v854
        %1046 = vmatpush1.bf16.msra.mxu0 %v853
        %1047 = vmatprep.subr.bf16.mxu0 %v856
        %1048 = vmatpush1.bf16.msra.mxu0 %v855
        %1049 = vmatprep.subr.bf16.mxu0 %v858
        %1050 = vmatpush1.bf16.msra.mxu0 %v857
        %1051 = vmatprep.mubr.bf16.mxu0 %v427
        %1052 = vmatmul.mubr.bf16.gmra.mrb[0].mxu0 %v426
        %v1053 = vpop.f32.mrb[0].mxu0
        %v1054 = vadd.f32 %v532, %v1053
        %v1055 = vpop.f32.mrb[0].mxu0
        %v1056 = vadd.f32 %v536, %v1055
        %v1057 = vpop.f32.mrb[0].mxu0
        %v1058 = vadd.f32 %v532, %v1057
        %v1059 = vpop.f32.mrb[0].mxu0
        %v1060 = vadd.f32 %v536, %v1059
        %1061 = vdwg.mxu0
        %1062 = vmatprep.subr.bf16.mxu0 %v860
        %1063 = vmatpush1.bf16.msra.mxu0 %v859
        %1064 = vmatprep.subr.bf16.mxu0 %v862
        %1065 = vmatpush1.bf16.msra.mxu0 %v861
        %1066 = vmatprep.subr.bf16.mxu0 %v864
        %1067 = vmatpush1.bf16.msra.mxu0 %v863
        %1068 = vmatprep.subr.bf16.mxu0 %v866
        %1069 = vmatpush1.bf16.msra.mxu0 %v865
        %1070 = vmatprep.subr.bf16.mxu0 %v868
        %1071 = vmatpush1.bf16.msra.mxu0 %v867
        %1072 = vmatprep.subr.bf16.mxu0 %v870
        %1073 = vmatpush1.bf16.msra.mxu0 %v869
        %1074 = vmatprep.subr.bf16.mxu0 %v872
        %1075 = vmatpush1.bf16.msra.mxu0 %v871
        %1076 = vmatprep.subr.bf16.mxu0 %v874
        %1077 = vmatpush1.bf16.msra.mxu0 %v873
        %1078 = vmatprep.subr.bf16.mxu0 %v876
        %1079 = vmatpush1.bf16.msra.mxu0 %v875
        %1080 = vmatprep.subr.bf16.mxu0 %v878
        %1081 = vmatpush1.bf16.msra.mxu0 %v877
        %1082 = vmatprep.subr.bf16.mxu0 %v880
        %1083 = vmatpush1.bf16.msra.mxu0 %v879
        %1084 = vmatprep.subr.bf16.mxu0 %v882
        %1085 = vmatpush1.bf16.msra.mxu0 %v881
        %1086 = vmatprep.subr.bf16.mxu0 %v884
        %1087 = vmatpush1.bf16.msra.mxu0 %v883
        %1088 = vmatprep.subr.bf16.mxu0 %v886
        %1089 = vmatpush1.bf16.msra.mxu0 %v885
        %1090 = vmatprep.subr.bf16.mxu0 %v888
        %1091 = vmatpush1.bf16.msra.mxu0 %v887
        %1092 = vmatprep.subr.bf16.mxu0 %v890
        %1093 = vmatpush1.bf16.msra.mxu0 %v889
        %1094 = vmatprep.mubr.bf16.mxu0 %v429
        %1095 = vmatmul.mubr.bf16.gmra.mrb[0].mxu0 %v428
        %v1096 = vpop.f32.mrb[0].mxu0
        %v1097 = vadd.f32 %v1054, %v1096
        %v1098 = vpop.f32.mrb[0].mxu0
        %v1099 = vadd.f32 %v1056, %v1098
        %v1100 = vpop.f32.mrb[0].mxu0
        %v1101 = vadd.f32 %v1058, %v1100
        %v1102 = vpop.f32.mrb[0].mxu0
        %v1103 = vadd.f32 %v1060, %v1102
        %1104 = vdwg.mxu0
        %1105 = vmatprep.subr.bf16.mxu0 %v892
        %1106 = vmatpush1.bf16.msra.mxu0 %v891
        %1107 = vmatprep.subr.bf16.mxu0 %v894
        %1108 = vmatpush1.bf16.msra.mxu0 %v893
        %1109 = vmatprep.subr.bf16.mxu0 %v896
        %1110 = vmatpush1.bf16.msra.mxu0 %v895
        %1111 = vmatprep.subr.bf16.mxu0 %v898
        %1112 = vmatpush1.bf16.msra.mxu0 %v897
        %1113 = vmatprep.subr.bf16.mxu0 %v900
        %1114 = vmatpush1.bf16.msra.mxu0 %v899
        %1115 = vmatprep.subr.bf16.mxu0 %v902
        %1116 = vmatpush1.bf16.msra.mxu0 %v901
        %1117 = vmatprep.subr.bf16.mxu0 %v904
        %1118 = vmatpush1.bf16.msra.mxu0 %v903
        %1119 = vmatprep.subr.bf16.mxu0 %v906
        %1120 = vmatpush1.bf16.msra.mxu0 %v905
        %1121 = vmatprep.subr.bf16.mxu0 %v908
        %1122 = vmatpush1.bf16.msra.mxu0 %v907
        %1123 = vmatprep.subr.bf16.mxu0 %v910
        %1124 = vmatpush1.bf16.msra.mxu0 %v909
        %1125 = vmatprep.subr.bf16.mxu0 %v912
        %1126 = vmatpush1.bf16.msra.mxu0 %v911
        %1127 = vmatprep.subr.bf16.mxu0 %v914
        %1128 = vmatpush1.bf16.msra.mxu0 %v913
        %1129 = vmatprep.subr.bf16.mxu0 %v916
        %1130 = vmatpush1.bf16.msra.mxu0 %v915
        %1131 = vmatprep.subr.bf16.mxu0 %v918
        %1132 = vmatpush1.bf16.msra.mxu0 %v917
        %1133 = vmatprep.subr.bf16.mxu0 %v920
        %1134 = vmatpush1.bf16.msra.mxu0 %v919
        %1135 = vmatprep.subr.bf16.mxu0 %v922
        %1136 = vmatpush1.bf16.msra.mxu0 %v921
        %1137 = vmatprep.mubr.bf16.mxu0 %v431
        %1138 = vmatmul.mubr.bf16.gmra.mrb[0].mxu0 %v430
        %v1139 = vpop.f32.mrb[0].mxu0
        %v1140 = vadd.f32 %v1097, %v1139
        %v1141 = vpop.f32.mrb[0].mxu0
        %v1142 = vadd.f32 %v1099, %v1141
        %v1143 = vpop.f32.mrb[0].mxu0
        %v1144 = vadd.f32 %v1101, %v1143
        %v1145 = vpop.f32.mrb[0].mxu0
        %v1146 = vadd.f32 %v1103, %v1145
        %1147 = vdwg.mxu0
        %v1148 = vmax.f32 %v1140, 0.0
        %v1149 = vmax.f32 %v1142, 0.0
        %v1150 = vmax.f32 %v1144, 0.0
        %v1151 = vmax.f32 %v1146, 0.0
        %v1152 = vld [vmem:[%s4] sm:$0x3]
        %v1153 = vrot.slane %v1148, 7
        %v1154 = vrot.slane %v1149, 7
        %v1155 = vrot.slane %v1150, 7
        %v1156 = vrot.slane %v1151, 7
        %v1157 = vsel %vm396, %v1153, %v1155
        %v1158 = vsel %vm396, %v1154, %v1156
        %v1159 = vsel %vm396, %v1155, %v1153
        %v1160 = vsel %vm396, %v1156, %v1154
        %v1161 = vsel %vm403, 0.0, %v1159
        %v1162 = vsel %vm403, 0.0, %v1160
        %v1163 = vsel %vm404, 0.0, %v1157
        %v1164 = vsel %vm404, 0.0, %v1158
        %v1165 = vrot.slane %v1148, 1
        %v1166 = vrot.slane %v1149, 1
        %v1167 = vrot.slane %v1150, 1
        %v1168 = vrot.slane %v1151, 1
        %v1169 = vsel %vm413, %v1165, %v1167
        %v1170 = vsel %vm413, %v1166, %v1168
        %v1171 = vsel %vm413, %v1167, %v1165
        %v1172 = vsel %vm413, %v1168, %v1166
        %v1173 = vsel %vm420, 0.0, %v1169
        %v1174 = vsel %vm420, 0.0, %v1170
        %v1175 = vsel %vm421, 0.0, %v1171
        %v1176 = vsel %vm421, 0.0, %v1172
        %v1177 = vpack.c.bf16 %v1163, %v1161
        %v1178 = vpack.c.bf16 %v1164, %v1162
        %v1179 = vpack.c.bf16 %v1150, %v1148
        %v1180 = vpack.c.bf16 %v1151, %v1149
        %v1181 = vpack.c.bf16 %v1175, %v1173
        %v1182 = vpack.c.bf16 %v1176, %v1174
        %v1183 = vld [vmem:[#allocation2] sm:$0xff]
        %v1184 = vld [vmem:[#allocation2 + $0x8] sm:$0xff]
        %v1185 = vld [vmem:[#allocation2 + $0x10] sm:$0xff]
        %v1186 = vld [vmem:[#allocation2 + $0x18] sm:$0xff]
        %v1187 = vld [vmem:[#allocation2 + $0x20] sm:$0xff]
        %v1188 = vld [vmem:[#allocation2 + $0x28] sm:$0xff]
        %v1189 = vld [vmem:[#allocation2 + $0x30] sm:$0xff]
        %v1190 = vld [vmem:[#allocation2 + $0x38] sm:$0xff]
        %v1191 = vld [vmem:[#allocation2 + $0x40] sm:$0xff]
        %v1192 = vld [vmem:[#allocation2 + $0x48] sm:$0xff]
        %v1193 = vld [vmem:[#allocation2 + $0x50] sm:$0xff]
        %v1194 = vld [vmem:[#allocation2 + $0x58] sm:$0xff]
        %v1195 = vld [vmem:[#allocation2 + $0x60] sm:$0xff]
        %v1196 = vld [vmem:[#allocation2 + $0x68] sm:$0xff]
        %v1197 = vld [vmem:[#allocation2 + $0x70] sm:$0xff]
        %v1198 = vld [vmem:[#allocation2 + $0x78] sm:$0xff]
        %v1199 = vld [vmem:[#allocation2 + $0x80] sm:$0xff]
        %v1200 = vld [vmem:[#allocation2 + $0x88] sm:$0xff]
        %v1201 = vld [vmem:[#allocation2 + $0x90] sm:$0xff]
        %v1202 = vld [vmem:[#allocation2 + $0x98] sm:$0xff]
        %v1203 = vld [vmem:[#allocation2 + $0xa0] sm:$0xff]
        %v1204 = vld [vmem:[#allocation2 + $0xa8] sm:$0xff]
        %v1205 = vld [vmem:[#allocation2 + $0xb0] sm:$0xff]
        %v1206 = vld [vmem:[#allocation2 + $0xb8] sm:$0xff]
        %v1207 = vld [vmem:[#allocation2 + $0xc0] sm:$0xff]
        %v1208 = vld [vmem:[#allocation2 + $0xc8] sm:$0xff]
        %v1209 = vld [vmem:[#allocation2 + $0xd0] sm:$0xff]
        %v1210 = vld [vmem:[#allocation2 + $0xd8] sm:$0xff]
        %v1211 = vld [vmem:[#allocation2 + $0xe0] sm:$0xff]
        %v1212 = vld [vmem:[#allocation2 + $0xe8] sm:$0xff]
        %v1213 = vld [vmem:[#allocation2 + $0xf0] sm:$0xff]
        %v1214 = vld [vmem:[#allocation2 + $0xf8] sm:$0xff]
        %v1215 = vld [vmem:[#allocation2 + $0x100] sm:$0xff]
        %v1216 = vld [vmem:[#allocation2 + $0x108] sm:$0xff]
        %v1217 = vld [vmem:[#allocation2 + $0x110] sm:$0xff]
        %v1218 = vld [vmem:[#allocation2 + $0x118] sm:$0xff]
        %v1219 = vld [vmem:[#allocation2 + $0x120] sm:$0xff]
        %v1220 = vld [vmem:[#allocation2 + $0x128] sm:$0xff]
        %v1221 = vld [vmem:[#allocation2 + $0x130] sm:$0xff]
        %v1222 = vld [vmem:[#allocation2 + $0x138] sm:$0xff]
        %v1223 = vld [vmem:[#allocation2 + $0x140] sm:$0xff]
        %v1224 = vld [vmem:[#allocation2 + $0x148] sm:$0xff]
        %v1225 = vld [vmem:[#allocation2 + $0x150] sm:$0xff]
        %v1226 = vld [vmem:[#allocation2 + $0x158] sm:$0xff]
        %v1227 = vld [vmem:[#allocation2 + $0x160] sm:$0xff]
        %v1228 = vld [vmem:[#allocation2 + $0x168] sm:$0xff]
        %v1229 = vld [vmem:[#allocation2 + $0x170] sm:$0xff]
        %v1230 = vld [vmem:[#allocation2 + $0x178] sm:$0xff]
        %v1231 = vld [vmem:[#allocation2 + $0x180] sm:$0xff]
        %v1232 = vld [vmem:[#allocation2 + $0x188] sm:$0xff]
        %v1233 = vld [vmem:[#allocation2 + $0x190] sm:$0xff]
        %v1234 = vld [vmem:[#allocation2 + $0x198] sm:$0xff]
        %v1235 = vld [vmem:[#allocation2 + $0x1a0] sm:$0xff]
        %v1236 = vld [vmem:[#allocation2 + $0x1a8] sm:$0xff]
        %v1237 = vld [vmem:[#allocation2 + $0x1b0] sm:$0xff]
        %v1238 = vld [vmem:[#allocation2 + $0x1b8] sm:$0xff]
        %v1239 = vld [vmem:[#allocation2 + $0x1c0] sm:$0xff]
        %v1240 = vld [vmem:[#allocation2 + $0x1c8] sm:$0xff]
        %v1241 = vld [vmem:[#allocation2 + $0x1d0] sm:$0xff]
        %v1242 = vld [vmem:[#allocation2 + $0x1d8] sm:$0xff]
        %v1243 = vld [vmem:[#allocation2 + $0x1e0] sm:$0xff]
        %v1244 = vld [vmem:[#allocation2 + $0x1e8] sm:$0xff]
        %v1245 = vld [vmem:[#allocation2 + $0x1f0] sm:$0xff]
        %v1246 = vld [vmem:[#allocation2 + $0x1f8] sm:$0xff]
        %v1247 = vld [vmem:[#allocation2 + $0x200] sm:$0xff]
        %v1248 = vld [vmem:[#allocation2 + $0x208] sm:$0xff]
        %v1249 = vld [vmem:[#allocation2 + $0x210] sm:$0xff]
        %v1250 = vld [vmem:[#allocation2 + $0x218] sm:$0xff]
        %v1251 = vld [vmem:[#allocation2 + $0x220] sm:$0xff]
        %v1252 = vld [vmem:[#allocation2 + $0x228] sm:$0xff]
        %v1253 = vld [vmem:[#allocation2 + $0x230] sm:$0xff]
        %v1254 = vld [vmem:[#allocation2 + $0x238] sm:$0xff]
        %v1255 = vld [vmem:[#allocation2 + $0x240] sm:$0xff]
        %v1256 = vld [vmem:[#allocation2 + $0x248] sm:$0xff]
        %v1257 = vld [vmem:[#allocation2 + $0x250] sm:$0xff]
        %v1258 = vld [vmem:[#allocation2 + $0x258] sm:$0xff]
        %v1259 = vld [vmem:[#allocation2 + $0x260] sm:$0xff]
        %v1260 = vld [vmem:[#allocation2 + $0x268] sm:$0xff]
        %v1261 = vld [vmem:[#allocation2 + $0x270] sm:$0xff]
        %v1262 = vld [vmem:[#allocation2 + $0x278] sm:$0xff]
        %v1263 = vld [vmem:[#allocation2 + $0x280] sm:$0xff]
        %v1264 = vld [vmem:[#allocation2 + $0x288] sm:$0xff]
        %v1265 = vld [vmem:[#allocation2 + $0x290] sm:$0xff]
        %v1266 = vld [vmem:[#allocation2 + $0x298] sm:$0xff]
        %v1267 = vld [vmem:[#allocation2 + $0x2a0] sm:$0xff]
        %v1268 = vld [vmem:[#allocation2 + $0x2a8] sm:$0xff]
        %v1269 = vld [vmem:[#allocation2 + $0x2b0] sm:$0xff]
        %v1270 = vld [vmem:[#allocation2 + $0x2b8] sm:$0xff]
        %v1271 = vld [vmem:[#allocation2 + $0x2c0] sm:$0xff]
        %v1272 = vld [vmem:[#allocation2 + $0x2c8] sm:$0xff]
        %v1273 = vld [vmem:[#allocation2 + $0x2d0] sm:$0xff]
        %v1274 = vld [vmem:[#allocation2 + $0x2d8] sm:$0xff]
        %v1275 = vld [vmem:[#allocation2 + $0x2e0] sm:$0xff]
        %v1276 = vld [vmem:[#allocation2 + $0x2e8] sm:$0xff]
        %v1277 = vld [vmem:[#allocation2 + $0x2f0] sm:$0xff]
        %v1278 = vld [vmem:[#allocation2 + $0x2f8] sm:$0xff]
        %v1280 = vlaneseq
        %v1281 = vshrl.u32 %v1280, 7
        %v1282 = vsub.s32 0, %v1281
        %v1283 = vrot.slane %v1152, %v1282
        %v1284 = vlaneseq
        %v1285 = vshrl.u32 %v1284, 7
        %v1286 = vsub.s32 1, %v1285
        %v1287 = vrot.slane %v1152, %v1286
        %v1386 = vunpack.c.l.b16 %v1183
        %v1387 = vunpack.c.h.b16 %v1183
        %v1388 = vunpack.c.l.b16 %v1184
        %v1389 = vunpack.c.h.b16 %v1184
        %v1390 = vunpack.c.l.b16 %v1185
        %v1391 = vunpack.c.h.b16 %v1185
        %v1392 = vunpack.c.l.b16 %v1186
        %v1393 = vunpack.c.h.b16 %v1186
        %v1394 = vunpack.c.l.b16 %v1187
        %v1395 = vunpack.c.h.b16 %v1187
        %v1396 = vunpack.c.l.b16 %v1188
        %v1397 = vunpack.c.h.b16 %v1188
        %v1398 = vunpack.c.l.b16 %v1189
        %v1399 = vunpack.c.h.b16 %v1189
        %v1400 = vunpack.c.l.b16 %v1190
        %v1401 = vunpack.c.h.b16 %v1190
        %v1402 = vunpack.c.l.b16 %v1191
        %v1403 = vunpack.c.h.b16 %v1191
        %v1404 = vunpack.c.l.b16 %v1192
        %v1405 = vunpack.c.h.b16 %v1192
        %v1406 = vunpack.c.l.b16 %v1193
        %v1407 = vunpack.c.h.b16 %v1193
        %v1408 = vunpack.c.l.b16 %v1194
        %v1409 = vunpack.c.h.b16 %v1194
        %v1410 = vunpack.c.l.b16 %v1195
        %v1411 = vunpack.c.h.b16 %v1195
        %v1412 = vunpack.c.l.b16 %v1196
        %v1413 = vunpack.c.h.b16 %v1196
        %v1414 = vunpack.c.l.b16 %v1197
        %v1415 = vunpack.c.h.b16 %v1197
        %v1416 = vunpack.c.l.b16 %v1198
        %v1417 = vunpack.c.h.b16 %v1198
        %v1418 = vunpack.c.l.b16 %v1199
        %v1419 = vunpack.c.h.b16 %v1199
        %v1420 = vunpack.c.l.b16 %v1200
        %v1421 = vunpack.c.h.b16 %v1200
        %v1422 = vunpack.c.l.b16 %v1201
        %v1423 = vunpack.c.h.b16 %v1201
        %v1424 = vunpack.c.l.b16 %v1202
        %v1425 = vunpack.c.h.b16 %v1202
        %v1426 = vunpack.c.l.b16 %v1203
        %v1427 = vunpack.c.h.b16 %v1203
        %v1428 = vunpack.c.l.b16 %v1204
        %v1429 = vunpack.c.h.b16 %v1204
        %v1430 = vunpack.c.l.b16 %v1205
        %v1431 = vunpack.c.h.b16 %v1205
        %v1432 = vunpack.c.l.b16 %v1206
        %v1433 = vunpack.c.h.b16 %v1206
        %v1434 = vunpack.c.l.b16 %v1207
        %v1435 = vunpack.c.h.b16 %v1207
        %v1436 = vunpack.c.l.b16 %v1208
        %v1437 = vunpack.c.h.b16 %v1208
        %v1438 = vunpack.c.l.b16 %v1209
        %v1439 = vunpack.c.h.b16 %v1209
        %v1440 = vunpack.c.l.b16 %v1210
        %v1441 = vunpack.c.h.b16 %v1210
        %v1442 = vunpack.c.l.b16 %v1211
        %v1443 = vunpack.c.h.b16 %v1211
        %v1444 = vunpack.c.l.b16 %v1212
        %v1445 = vunpack.c.h.b16 %v1212
        %v1446 = vunpack.c.l.b16 %v1213
        %v1447 = vunpack.c.h.b16 %v1213
        %v1448 = vunpack.c.l.b16 %v1214
        %v1449 = vunpack.c.h.b16 %v1214
        %v1450 = vunpack.c.l.b16 %v1215
        %v1451 = vunpack.c.h.b16 %v1215
        %v1452 = vunpack.c.l.b16 %v1216
        %v1453 = vunpack.c.h.b16 %v1216
        %v1454 = vunpack.c.l.b16 %v1217
        %v1455 = vunpack.c.h.b16 %v1217
        %v1456 = vunpack.c.l.b16 %v1218
        %v1457 = vunpack.c.h.b16 %v1218
        %v1458 = vunpack.c.l.b16 %v1219
        %v1459 = vunpack.c.h.b16 %v1219
        %v1460 = vunpack.c.l.b16 %v1220
        %v1461 = vunpack.c.h.b16 %v1220
        %v1462 = vunpack.c.l.b16 %v1221
        %v1463 = vunpack.c.h.b16 %v1221
        %v1464 = vunpack.c.l.b16 %v1222
        %v1465 = vunpack.c.h.b16 %v1222
        %v1466 = vunpack.c.l.b16 %v1223
        %v1467 = vunpack.c.h.b16 %v1223
        %v1468 = vunpack.c.l.b16 %v1224
        %v1469 = vunpack.c.h.b16 %v1224
        %v1470 = vunpack.c.l.b16 %v1225
        %v1471 = vunpack.c.h.b16 %v1225
        %v1472 = vunpack.c.l.b16 %v1226
        %v1473 = vunpack.c.h.b16 %v1226
        %v1474 = vunpack.c.l.b16 %v1227
        %v1475 = vunpack.c.h.b16 %v1227
        %v1476 = vunpack.c.l.b16 %v1228
        %v1477 = vunpack.c.h.b16 %v1228
        %v1478 = vunpack.c.l.b16 %v1229
        %v1479 = vunpack.c.h.b16 %v1229
        %v1480 = vunpack.c.l.b16 %v1230
        %v1481 = vunpack.c.h.b16 %v1230
        %v1482 = vunpack.c.l.b16 %v1231
        %v1483 = vunpack.c.h.b16 %v1231
        %v1484 = vunpack.c.l.b16 %v1232
        %v1485 = vunpack.c.h.b16 %v1232
        %v1486 = vunpack.c.l.b16 %v1233
        %v1487 = vunpack.c.h.b16 %v1233
        %v1488 = vunpack.c.l.b16 %v1234
        %v1489 = vunpack.c.h.b16 %v1234
        %v1490 = vunpack.c.l.b16 %v1235
        %v1491 = vunpack.c.h.b16 %v1235
        %v1492 = vunpack.c.l.b16 %v1236
        %v1493 = vunpack.c.h.b16 %v1236
        %v1494 = vunpack.c.l.b16 %v1237
        %v1495 = vunpack.c.h.b16 %v1237
        %v1496 = vunpack.c.l.b16 %v1238
        %v1497 = vunpack.c.h.b16 %v1238
        %v1498 = vunpack.c.l.b16 %v1239
        %v1499 = vunpack.c.h.b16 %v1239
        %v1500 = vunpack.c.l.b16 %v1240
        %v1501 = vunpack.c.h.b16 %v1240
        %v1502 = vunpack.c.l.b16 %v1241
        %v1503 = vunpack.c.h.b16 %v1241
        %v1504 = vunpack.c.l.b16 %v1242
        %v1505 = vunpack.c.h.b16 %v1242
        %v1506 = vunpack.c.l.b16 %v1243
        %v1507 = vunpack.c.h.b16 %v1243
        %v1508 = vunpack.c.l.b16 %v1244
        %v1509 = vunpack.c.h.b16 %v1244
        %v1510 = vunpack.c.l.b16 %v1245
        %v1511 = vunpack.c.h.b16 %v1245
        %v1512 = vunpack.c.l.b16 %v1246
        %v1513 = vunpack.c.h.b16 %v1246
        %v1514 = vunpack.c.l.b16 %v1247
        %v1515 = vunpack.c.h.b16 %v1247
        %v1516 = vunpack.c.l.b16 %v1248
        %v1517 = vunpack.c.h.b16 %v1248
        %v1518 = vunpack.c.l.b16 %v1249
        %v1519 = vunpack.c.h.b16 %v1249
        %v1520 = vunpack.c.l.b16 %v1250
        %v1521 = vunpack.c.h.b16 %v1250
        %v1522 = vunpack.c.l.b16 %v1251
        %v1523 = vunpack.c.h.b16 %v1251
        %v1524 = vunpack.c.l.b16 %v1252
        %v1525 = vunpack.c.h.b16 %v1252
        %v1526 = vunpack.c.l.b16 %v1253
        %v1527 = vunpack.c.h.b16 %v1253
        %v1528 = vunpack.c.l.b16 %v1254
        %v1529 = vunpack.c.h.b16 %v1254
        %v1530 = vunpack.c.l.b16 %v1255
        %v1531 = vunpack.c.h.b16 %v1255
        %v1532 = vunpack.c.l.b16 %v1256
        %v1533 = vunpack.c.h.b16 %v1256
        %v1534 = vunpack.c.l.b16 %v1257
        %v1535 = vunpack.c.h.b16 %v1257
        %v1536 = vunpack.c.l.b16 %v1258
        %v1537 = vunpack.c.h.b16 %v1258
        %v1538 = vunpack.c.l.b16 %v1259
        %v1539 = vunpack.c.h.b16 %v1259
        %v1540 = vunpack.c.l.b16 %v1260
        %v1541 = vunpack.c.h.b16 %v1260
        %v1542 = vunpack.c.l.b16 %v1261
        %v1543 = vunpack.c.h.b16 %v1261
        %v1544 = vunpack.c.l.b16 %v1262
        %v1545 = vunpack.c.h.b16 %v1262
        %v1546 = vunpack.c.l.b16 %v1263
        %v1547 = vunpack.c.h.b16 %v1263
        %v1548 = vunpack.c.l.b16 %v1264
        %v1549 = vunpack.c.h.b16 %v1264
        %v1550 = vunpack.c.l.b16 %v1265
        %v1551 = vunpack.c.h.b16 %v1265
        %v1552 = vunpack.c.l.b16 %v1266
        %v1553 = vunpack.c.h.b16 %v1266
        %v1554 = vunpack.c.l.b16 %v1267
        %v1555 = vunpack.c.h.b16 %v1267
        %v1556 = vunpack.c.l.b16 %v1268
        %v1557 = vunpack.c.h.b16 %v1268
        %v1558 = vunpack.c.l.b16 %v1269
        %v1559 = vunpack.c.h.b16 %v1269
        %v1560 = vunpack.c.l.b16 %v1270
        %v1561 = vunpack.c.h.b16 %v1270
        %v1562 = vunpack.c.l.b16 %v1271
        %v1563 = vunpack.c.h.b16 %v1271
        %v1564 = vunpack.c.l.b16 %v1272
        %v1565 = vunpack.c.h.b16 %v1272
        %v1566 = vunpack.c.l.b16 %v1273
        %v1567 = vunpack.c.h.b16 %v1273
        %v1568 = vunpack.c.l.b16 %v1274
        %v1569 = vunpack.c.h.b16 %v1274
        %v1570 = vunpack.c.l.b16 %v1275
        %v1571 = vunpack.c.h.b16 %v1275
        %v1572 = vunpack.c.l.b16 %v1276
        %v1573 = vunpack.c.h.b16 %v1276
        %v1574 = vunpack.c.l.b16 %v1277
        %v1575 = vunpack.c.h.b16 %v1277
        %v1576 = vunpack.c.l.b16 %v1278
        %v1577 = vunpack.c.h.b16 %v1278
        %v1578 = vpack.c.b16 %v1388, %v1386
        %v1579 = vpack.c.b16 %v1389, %v1387
        %v1580 = vpack.c.b16 %v1392, %v1390
        %v1581 = vpack.c.b16 %v1393, %v1391
        %v1582 = vpack.c.b16 %v1396, %v1394
        %v1583 = vpack.c.b16 %v1397, %v1395
        %v1584 = vpack.c.b16 %v1400, %v1398
        %v1585 = vpack.c.b16 %v1401, %v1399
        %v1586 = vpack.c.b16 %v1404, %v1402
        %v1587 = vpack.c.b16 %v1405, %v1403
        %v1588 = vpack.c.b16 %v1408, %v1406
        %v1589 = vpack.c.b16 %v1409, %v1407
        %v1590 = vpack.c.b16 %v1412, %v1410
        %v1591 = vpack.c.b16 %v1413, %v1411
        %v1592 = vpack.c.b16 %v1416, %v1414
        %v1593 = vpack.c.b16 %v1417, %v1415
        %v1594 = vpack.c.b16 %v1420, %v1418
        %v1595 = vpack.c.b16 %v1421, %v1419
        %v1596 = vpack.c.b16 %v1424, %v1422
        %v1597 = vpack.c.b16 %v1425, %v1423
        %v1598 = vpack.c.b16 %v1428, %v1426
        %v1599 = vpack.c.b16 %v1429, %v1427
        %v1600 = vpack.c.b16 %v1432, %v1430
        %v1601 = vpack.c.b16 %v1433, %v1431
        %v1602 = vpack.c.b16 %v1436, %v1434
        %v1603 = vpack.c.b16 %v1437, %v1435
        %v1604 = vpack.c.b16 %v1440, %v1438
        %v1605 = vpack.c.b16 %v1441, %v1439
        %v1606 = vpack.c.b16 %v1444, %v1442
        %v1607 = vpack.c.b16 %v1445, %v1443
        %v1608 = vpack.c.b16 %v1448, %v1446
        %v1609 = vpack.c.b16 %v1449, %v1447
        %v1610 = vpack.c.b16 %v1452, %v1450
        %v1611 = vpack.c.b16 %v1453, %v1451
        %v1612 = vpack.c.b16 %v1456, %v1454
        %v1613 = vpack.c.b16 %v1457, %v1455
        %v1614 = vpack.c.b16 %v1460, %v1458
        %v1615 = vpack.c.b16 %v1461, %v1459
        %v1616 = vpack.c.b16 %v1464, %v1462
        %v1617 = vpack.c.b16 %v1465, %v1463
        %v1618 = vpack.c.b16 %v1468, %v1466
        %v1619 = vpack.c.b16 %v1469, %v1467
        %v1620 = vpack.c.b16 %v1472, %v1470
        %v1621 = vpack.c.b16 %v1473, %v1471
        %v1622 = vpack.c.b16 %v1476, %v1474
        %v1623 = vpack.c.b16 %v1477, %v1475
        %v1624 = vpack.c.b16 %v1480, %v1478
        %v1625 = vpack.c.b16 %v1481, %v1479
        %v1626 = vpack.c.b16 %v1484, %v1482
        %v1627 = vpack.c.b16 %v1485, %v1483
        %v1628 = vpack.c.b16 %v1488, %v1486
        %v1629 = vpack.c.b16 %v1489, %v1487
        %v1630 = vpack.c.b16 %v1492, %v1490
        %v1631 = vpack.c.b16 %v1493, %v1491
        %v1632 = vpack.c.b16 %v1496, %v1494
        %v1633 = vpack.c.b16 %v1497, %v1495
        %v1634 = vpack.c.b16 %v1500, %v1498
        %v1635 = vpack.c.b16 %v1501, %v1499
        %v1636 = vpack.c.b16 %v1504, %v1502
        %v1637 = vpack.c.b16 %v1505, %v1503
        %v1638 = vpack.c.b16 %v1508, %v1506
        %v1639 = vpack.c.b16 %v1509, %v1507
        %v1640 = vpack.c.b16 %v1512, %v1510
        %v1641 = vpack.c.b16 %v1513, %v1511
        %v1642 = vpack.c.b16 %v1516, %v1514
        %v1643 = vpack.c.b16 %v1517, %v1515
        %v1644 = vpack.c.b16 %v1520, %v1518
        %v1645 = vpack.c.b16 %v1521, %v1519
        %v1646 = vpack.c.b16 %v1524, %v1522
        %v1647 = vpack.c.b16 %v1525, %v1523
        %v1648 = vpack.c.b16 %v1528, %v1526
        %v1649 = vpack.c.b16 %v1529, %v1527
        %v1650 = vpack.c.b16 %v1532, %v1530
        %v1651 = vpack.c.b16 %v1533, %v1531
        %v1652 = vpack.c.b16 %v1536, %v1534
        %v1653 = vpack.c.b16 %v1537, %v1535
        %v1654 = vpack.c.b16 %v1540, %v1538
        %v1655 = vpack.c.b16 %v1541, %v1539
        %v1656 = vpack.c.b16 %v1544, %v1542
        %v1657 = vpack.c.b16 %v1545, %v1543
        %v1658 = vpack.c.b16 %v1548, %v1546
        %v1659 = vpack.c.b16 %v1549, %v1547
        %v1660 = vpack.c.b16 %v1552, %v1550
        %v1661 = vpack.c.b16 %v1553, %v1551
        %v1662 = vpack.c.b16 %v1556, %v1554
        %v1663 = vpack.c.b16 %v1557, %v1555
        %v1664 = vpack.c.b16 %v1560, %v1558
        %v1665 = vpack.c.b16 %v1561, %v1559
        %v1666 = vpack.c.b16 %v1564, %v1562
        %v1667 = vpack.c.b16 %v1565, %v1563
        %v1668 = vpack.c.b16 %v1568, %v1566
        %v1669 = vpack.c.b16 %v1569, %v1567
        %v1670 = vpack.c.b16 %v1572, %v1570
        %v1671 = vpack.c.b16 %v1573, %v1571
        %v1672 = vpack.c.b16 %v1576, %v1574
        %v1673 = vpack.c.b16 %v1577, %v1575
        %1770 = vmatprep.subr.bf16.mxu0 %v1579
        %1771 = vmatpush1.bf16.msra.mxu0 %v1578
        %1772 = vmatprep.subr.bf16.mxu0 %v1581
        %1773 = vmatpush1.bf16.msra.mxu0 %v1580
        %1774 = vmatprep.subr.bf16.mxu0 %v1583
        %1775 = vmatpush1.bf16.msra.mxu0 %v1582
        %1776 = vmatprep.subr.bf16.mxu0 %v1585
        %1777 = vmatpush1.bf16.msra.mxu0 %v1584
        %1778 = vmatprep.subr.bf16.mxu0 %v1587
        %1779 = vmatpush1.bf16.msra.mxu0 %v1586
        %1780 = vmatprep.subr.bf16.mxu0 %v1589
        %1781 = vmatpush1.bf16.msra.mxu0 %v1588
        %1782 = vmatprep.subr.bf16.mxu0 %v1591
        %1783 = vmatpush1.bf16.msra.mxu0 %v1590
        %1784 = vmatprep.subr.bf16.mxu0 %v1593
        %1785 = vmatpush1.bf16.msra.mxu0 %v1592
        %1786 = vmatprep.subr.bf16.mxu0 %v1595
        %1787 = vmatpush1.bf16.msra.mxu0 %v1594
        %1788 = vmatprep.subr.bf16.mxu0 %v1597
        %1789 = vmatpush1.bf16.msra.mxu0 %v1596
        %1790 = vmatprep.subr.bf16.mxu0 %v1599
        %1791 = vmatpush1.bf16.msra.mxu0 %v1598
        %1792 = vmatprep.subr.bf16.mxu0 %v1601
        %1793 = vmatpush1.bf16.msra.mxu0 %v1600
        %1794 = vmatprep.subr.bf16.mxu0 %v1603
        %1795 = vmatpush1.bf16.msra.mxu0 %v1602
        %1796 = vmatprep.subr.bf16.mxu0 %v1605
        %1797 = vmatpush1.bf16.msra.mxu0 %v1604
        %1798 = vmatprep.subr.bf16.mxu0 %v1607
        %1799 = vmatpush1.bf16.msra.mxu0 %v1606
        %1800 = vmatprep.subr.bf16.mxu0 %v1609
        %1801 = vmatpush1.bf16.msra.mxu0 %v1608
        %1802 = vmatprep.mubr.bf16.mxu0 %v1178
        %1803 = vmatmul.mubr.bf16.gmra.mrb[0].mxu0 %v1177
        %v1804 = vpop.f32.mrb[0].mxu0
        %v1805 = vadd.f32 %v1283, %v1804
        %v1806 = vpop.f32.mrb[0].mxu0
        %v1807 = vadd.f32 %v1287, %v1806
        %v1808 = vpop.f32.mrb[0].mxu0
        %v1809 = vadd.f32 %v1283, %v1808
        %v1810 = vpop.f32.mrb[0].mxu0
        %v1811 = vadd.f32 %v1287, %v1810
        %1812 = vdwg.mxu0
        %1813 = vmatprep.subr.bf16.mxu0 %v1611
        %1814 = vmatpush1.bf16.msra.mxu0 %v1610
        %1815 = vmatprep.subr.bf16.mxu0 %v1613
        %1816 = vmatpush1.bf16.msra.mxu0 %v1612
        %1817 = vmatprep.subr.bf16.mxu0 %v1615
        %1818 = vmatpush1.bf16.msra.mxu0 %v1614
        %1819 = vmatprep.subr.bf16.mxu0 %v1617
        %1820 = vmatpush1.bf16.msra.mxu0 %v1616
        %1821 = vmatprep.subr.bf16.mxu0 %v1619
        %1822 = vmatpush1.bf16.msra.mxu0 %v1618
        %1823 = vmatprep.subr.bf16.mxu0 %v1621
        %1824 = vmatpush1.bf16.msra.mxu0 %v1620
        %1825 = vmatprep.subr.bf16.mxu0 %v1623
        %1826 = vmatpush1.bf16.msra.mxu0 %v1622
        %1827 = vmatprep.subr.bf16.mxu0 %v1625
        %1828 = vmatpush1.bf16.msra.mxu0 %v1624
        %1829 = vmatprep.subr.bf16.mxu0 %v1627
        %1830 = vmatpush1.bf16.msra.mxu0 %v1626
        %1831 = vmatprep.subr.bf16.mxu0 %v1629
        %1832 = vmatpush1.bf16.msra.mxu0 %v1628
        %1833 = vmatprep.subr.bf16.mxu0 %v1631
        %1834 = vmatpush1.bf16.msra.mxu0 %v1630
        %1835 = vmatprep.subr.bf16.mxu0 %v1633
        %1836 = vmatpush1.bf16.msra.mxu0 %v1632
        %1837 = vmatprep.subr.bf16.mxu0 %v1635
        %1838 = vmatpush1.bf16.msra.mxu0 %v1634
        %1839 = vmatprep.subr.bf16.mxu0 %v1637
        %1840 = vmatpush1.bf16.msra.mxu0 %v1636
        %1841 = vmatprep.subr.bf16.mxu0 %v1639
        %1842 = vmatpush1.bf16.msra.mxu0 %v1638
        %1843 = vmatprep.subr.bf16.mxu0 %v1641
        %1844 = vmatpush1.bf16.msra.mxu0 %v1640
        %1845 = vmatprep.mubr.bf16.mxu0 %v1180
        %1846 = vmatmul.mubr.bf16.gmra.mrb[0].mxu0 %v1179
        %v1847 = vpop.f32.mrb[0].mxu0
        %v1848 = vadd.f32 %v1805, %v1847
        %v1849 = vpop.f32.mrb[0].mxu0
        %v1850 = vadd.f32 %v1807, %v1849
        %v1851 = vpop.f32.mrb[0].mxu0
        %v1852 = vadd.f32 %v1809, %v1851
        %v1853 = vpop.f32.mrb[0].mxu0
        %v1854 = vadd.f32 %v1811, %v1853
        %1855 = vdwg.mxu0
        %1856 = vmatprep.subr.bf16.mxu0 %v1643
        %1857 = vmatpush1.bf16.msra.mxu0 %v1642
        %1858 = vmatprep.subr.bf16.mxu0 %v1645
        %1859 = vmatpush1.bf16.msra.mxu0 %v1644
        %1860 = vmatprep.subr.bf16.mxu0 %v1647
        %1861 = vmatpush1.bf16.msra.mxu0 %v1646
        %1862 = vmatprep.subr.bf16.mxu0 %v1649
        %1863 = vmatpush1.bf16.msra.mxu0 %v1648
        %1864 = vmatprep.subr.bf16.mxu0 %v1651
        %1865 = vmatpush1.bf16.msra.mxu0 %v1650
        %1866 = vmatprep.subr.bf16.mxu0 %v1653
        %1867 = vmatpush1.bf16.msra.mxu0 %v1652
        %1868 = vmatprep.subr.bf16.mxu0 %v1655
        %1869 = vmatpush1.bf16.msra.mxu0 %v1654
        %1870 = vmatprep.subr.bf16.mxu0 %v1657
        %1871 = vmatpush1.bf16.msra.mxu0 %v1656
        %1872 = vmatprep.subr.bf16.mxu0 %v1659
        %1873 = vmatpush1.bf16.msra.mxu0 %v1658
        %1874 = vmatprep.subr.bf16.mxu0 %v1661
        %1875 = vmatpush1.bf16.msra.mxu0 %v1660
        %1876 = vmatprep.subr.bf16.mxu0 %v1663
        %1877 = vmatpush1.bf16.msra.mxu0 %v1662
        %1878 = vmatprep.subr.bf16.mxu0 %v1665
        %1879 = vmatpush1.bf16.msra.mxu0 %v1664
        %1880 = vmatprep.subr.bf16.mxu0 %v1667
        %1881 = vmatpush1.bf16.msra.mxu0 %v1666
        %1882 = vmatprep.subr.bf16.mxu0 %v1669
        %1883 = vmatpush1.bf16.msra.mxu0 %v1668
        %1884 = vmatprep.subr.bf16.mxu0 %v1671
        %1885 = vmatpush1.bf16.msra.mxu0 %v1670
        %1886 = vmatprep.subr.bf16.mxu0 %v1673
        %1887 = vmatpush1.bf16.msra.mxu0 %v1672
        %1888 = vmatprep.mubr.bf16.mxu0 %v1182
        %1889 = vmatmul.mubr.bf16.gmra.mrb[0].mxu0 %v1181
        %v1890 = vpop.f32.mrb[0].mxu0
        %v1891 = vadd.f32 %v1848, %v1890
        %v1892 = vpop.f32.mrb[0].mxu0
        %v1893 = vadd.f32 %v1850, %v1892
        %v1894 = vpop.f32.mrb[0].mxu0
        %v1895 = vadd.f32 %v1852, %v1894
        %v1896 = vpop.f32.mrb[0].mxu0
        %v1897 = vadd.f32 %v1854, %v1896
        %1898 = vdwg.mxu0
        %v1899 = vadd.f32 %v1891, %v1895
        %v1900 = vrot.slane %v1899, 4
        %v1901 = vadd.f32 %v1899, %v1900
        %v1902 = vrot.slane %v1901, 2
        %v1903 = vadd.f32 %v1901, %v1902
        %v1904 = vrot.slane %v1903, 1
        %v1905 = vadd.f32 %v1903, %v1904
        %v1906 = vadd.f32 %v1893, %v1897
        %v1907 = vrot.slane %v1906, 4
        %v1908 = vadd.f32 %v1906, %v1907
        %v1909 = vrot.slane %v1908, 2
        %v1910 = vadd.f32 %v1908, %v1909
        %v1911 = vrot.slane %v1910, 1
        %v1912 = vadd.f32 %v1910, %v1911
        %v1913 = vld [vmem:[%s5] sm:$0xff]
        %v1914 = vld [vmem:[%s5 + $0x8] sm:$0xff]
        %v1915 = vld [vmem:[%s5 + $0x10] sm:$0xff]
        %v1916 = vld [vmem:[%s5 + $0x18] sm:$0xff]
        %v1917 = vld [vmem:[%s5 + $0x20] sm:$0xff]
        %v1918 = vld [vmem:[%s5 + $0x28] sm:$0xff]
        %v1919 = vld [vmem:[%s5 + $0x30] sm:$0xff]
        %v1920 = vld [vmem:[%s5 + $0x38] sm:$0xff]
        %v1921 = vld [vmem:[%s5 + $0x40] sm:$0xff]
        %v1922 = vld [vmem:[%s5 + $0x48] sm:$0xff]
        %v1923 = vld [vmem:[%s5 + $0x50] sm:$0xff]
        %v1924 = vld [vmem:[%s5 + $0x58] sm:$0xff]
        %v1925 = vld [vmem:[%s5 + $0x60] sm:$0xff]
        %v1926 = vld [vmem:[%s5 + $0x68] sm:$0xff]
        %v1927 = vld [vmem:[%s5 + $0x70] sm:$0xff]
        %v1928 = vld [vmem:[%s5 + $0x78] sm:$0xff]
        %v1929 = vld [vmem:[%s5 + $0x80] sm:$0xff]
        %v1930 = vld [vmem:[%s5 + $0x88] sm:$0xff]
        %v1931 = vld [vmem:[%s5 + $0x90] sm:$0xff]
        %v1932 = vld [vmem:[%s5 + $0x98] sm:$0xff]
        %v1933 = vld [vmem:[%s5 + $0xa0] sm:$0xff]
        %v1934 = vld [vmem:[%s5 + $0xa8] sm:$0xff]
        %v1935 = vld [vmem:[%s5 + $0xb0] sm:$0xff]
        %v1936 = vld [vmem:[%s5 + $0xb8] sm:$0xff]
        %v1937 = vld [vmem:[%s5 + $0xc0] sm:$0xff]
        %v1938 = vld [vmem:[%s5 + $0xc8] sm:$0xff]
        %v1939 = vld [vmem:[%s5 + $0xd0] sm:$0xff]
        %v1940 = vld [vmem:[%s5 + $0xd8] sm:$0xff]
        %v1941 = vld [vmem:[%s5 + $0xe0] sm:$0xff]
        %v1942 = vld [vmem:[%s5 + $0xe8] sm:$0xff]
        %v1943 = vld [vmem:[%s5 + $0xf0] sm:$0xff]
        %v1944 = vld [vmem:[%s5 + $0xf8] sm:$0xff]
        %v1945 = vld [vmem:[%s6] sm:$0x1]
        %1946 = vmatprep.subr.mxu0 0.0
        %1947 = vmatpush1.msra.mxu0 %v1913
        %1948 = vmatprep.subr.mxu0 0.0
        %1949 = vmatpush1.msra.mxu0 %v1914
        %1950 = vmatprep.subr.mxu0 0.0
        %1951 = vmatpush1.msra.mxu0 %v1915
        %1952 = vmatprep.subr.mxu0 0.0
        %1953 = vmatpush1.msra.mxu0 %v1916
        %1954 = vmatprep.subr.mxu0 0.0
        %1955 = vmatpush1.msra.mxu0 %v1917
        %1956 = vmatprep.subr.mxu0 0.0
        %1957 = vmatpush1.msra.mxu0 %v1918
        %1958 = vmatprep.subr.mxu0 0.0
        %1959 = vmatpush1.msra.mxu0 %v1919
        %1960 = vmatprep.subr.mxu0 0.0
        %1961 = vmatpush1.msra.mxu0 %v1920
        %1962 = vmatprep.subr.mxu0 0.0
        %1963 = vmatpush1.msra.mxu0 %v1921
        %1964 = vmatprep.subr.mxu0 0.0
        %1965 = vmatpush1.msra.mxu0 %v1922
        %1966 = vmatprep.subr.mxu0 0.0
        %1967 = vmatpush1.msra.mxu0 %v1923
        %1968 = vmatprep.subr.mxu0 0.0
        %1969 = vmatpush1.msra.mxu0 %v1924
        %1970 = vmatprep.subr.mxu0 0.0
        %1971 = vmatpush1.msra.mxu0 %v1925
        %1972 = vmatprep.subr.mxu0 0.0
        %1973 = vmatpush1.msra.mxu0 %v1926
        %1974 = vmatprep.subr.mxu0 0.0
        %1975 = vmatpush1.msra.mxu0 %v1927
        %1976 = vmatprep.subr.mxu0 0.0
        %1977 = vmatpush1.msra.mxu0 %v1928
        %1978 = vmatprep.subr.mxu0 0.0
        %1979 = vmatpush1.msra.mxu0 %v1929
        %1980 = vmatprep.subr.mxu0 0.0
        %1981 = vmatpush1.msra.mxu0 %v1930
        %1982 = vmatprep.subr.mxu0 0.0
        %1983 = vmatpush1.msra.mxu0 %v1931
        %1984 = vmatprep.subr.mxu0 0.0
        %1985 = vmatpush1.msra.mxu0 %v1932
        %1986 = vmatprep.subr.mxu0 0.0
        %1987 = vmatpush1.msra.mxu0 %v1933
        %1988 = vmatprep.subr.mxu0 0.0
        %1989 = vmatpush1.msra.mxu0 %v1934
        %1990 = vmatprep.subr.mxu0 0.0
        %1991 = vmatpush1.msra.mxu0 %v1935
        %1992 = vmatprep.subr.mxu0 0.0
        %1993 = vmatpush1.msra.mxu0 %v1936
        %1994 = vmatprep.subr.mxu0 0.0
        %1995 = vmatpush1.msra.mxu0 %v1937
        %1996 = vmatprep.subr.mxu0 0.0
        %1997 = vmatpush1.msra.mxu0 %v1938
        %1998 = vmatprep.subr.mxu0 0.0
        %1999 = vmatpush1.msra.mxu0 %v1939
        %2000 = vmatprep.subr.mxu0 0.0
        %2001 = vmatpush1.msra.mxu0 %v1940
        %2002 = vmatprep.subr.mxu0 0.0
        %2003 = vmatpush1.msra.mxu0 %v1941
        %2004 = vmatprep.subr.mxu0 0.0
        %2005 = vmatpush1.msra.mxu0 %v1942
        %2006 = vmatprep.subr.mxu0 0.0
        %2007 = vmatpush1.msra.mxu0 %v1943
        %2008 = vmatprep.subr.mxu0 0.0
        %2009 = vmatpush1.msra.mxu0 %v1944
        %2010 = vmatprep.mubr.f32.mxu0 %v1912
        %2011 = vmatmul.mubr.f32.gmra.mrb[0].mxu0 %v1905
        %v2012 = vpop.f32.mrb[0].mxu0
        %v2013 = vadd.f32 %v1945, %v2012
        %v2014 = vpop.f32.mrb[0].mxu0
        %2015 = vdwg.mxu0
        %v2016 = vmax.f32 %v2013, 0.0
        %v2017 = vld [vmem:[%s7] sm:$0xff]
        %v2018 = vld [vmem:[%s7 + $0x8] sm:$0xff]
        %v2019 = vld [vmem:[%s7 + $0x10] sm:$0xff]
        %v2020 = vld [vmem:[%s7 + $0x18] sm:$0xff]
        %v2021 = vld [vmem:[%s8] sm:$0xf]
        %v2023 = vlaneseq
        %v2024 = vshrl.u32 %v2023, 7
        %v2025 = vsub.s32 0, %v2024
        %v2026 = vrot.slane %v2021, %v2025
        %v2027 = vlaneseq
        %v2028 = vshrl.u32 %v2027, 7
        %v2029 = vsub.s32 1, %v2028
        %v2030 = vrot.slane %v2021, %v2029
        %v2031 = vlaneseq
        %v2032 = vshrl.u32 %v2031, 7
        %v2033 = vsub.s32 2, %v2032
        %v2034 = vrot.slane %v2021, %v2033
        %v2035 = vlaneseq
        %v2036 = vshrl.u32 %v2035, 7
        %v2037 = vsub.s32 3, %v2036
        %v2038 = vrot.slane %v2021, %v2037
        %vm2043 = vcmask 64512
        %v2045 = vsel %vm2043, %v2016, 0
        %2047 = vmatprep.subr.mxu0 %v2018
        %2048 = vmatpush1.msra.mxu0 %v2017
        %2049 = vmatprep.subr.mxu0 0.0
        %2050 = vmatpush1.msra.mxu0 0.0
        %2051 = vmatprep.subr.mxu0 0.0
        %2052 = vmatpush1.msra.mxu0 0.0
        %2053 = vmatprep.subr.mxu0 0.0
        %2054 = vmatpush1.msra.mxu0 0.0
        %2055 = vmatprep.subr.mxu0 0.0
        %2056 = vmatpush1.msra.mxu0 0.0
        %2057 = vmatprep.subr.mxu0 0.0
        %2058 = vmatpush1.msra.mxu0 0.0
        %2059 = vmatprep.subr.mxu0 0.0
        %2060 = vmatpush1.msra.mxu0 0.0
        %2061 = vmatprep.subr.mxu0 0.0
        %2062 = vmatpush1.msra.mxu0 0.0
        %2063 = vmatprep.subr.mxu0 0.0
        %2064 = vmatpush1.msra.mxu0 0.0
        %2065 = vmatprep.subr.mxu0 0.0
        %2066 = vmatpush1.msra.mxu0 0.0
        %2067 = vmatprep.subr.mxu0 0.0
        %2068 = vmatpush1.msra.mxu0 0.0
        %2069 = vmatprep.subr.mxu0 0.0
        %2070 = vmatpush1.msra.mxu0 0.0
        %2071 = vmatprep.subr.mxu0 0.0
        %2072 = vmatpush1.msra.mxu0 0.0
        %2073 = vmatprep.subr.mxu0 0.0
        %2074 = vmatpush1.msra.mxu0 0.0
        %2075 = vmatprep.subr.mxu0 0.0
        %2076 = vmatpush1.msra.mxu0 0.0
        %2077 = vmatprep.subr.mxu0 0.0
        %2078 = vmatpush1.msra.mxu0 0.0
        %2079 = vmatprep.subr.mxu0 0.0
        %2080 = vmatpush1.msra.mxu0 0.0
        %2081 = vmatprep.subr.mxu0 0.0
        %2082 = vmatpush1.msra.mxu0 0.0
        %2083 = vmatprep.subr.mxu0 0.0
        %2084 = vmatpush1.msra.mxu0 0.0
        %2085 = vmatprep.subr.mxu0 0.0
        %2086 = vmatpush1.msra.mxu0 0.0
        %2087 = vmatprep.subr.mxu0 0.0
        %2088 = vmatpush1.msra.mxu0 0.0
        %2089 = vmatprep.subr.mxu0 0.0
        %2090 = vmatpush1.msra.mxu0 0.0
        %2091 = vmatprep.subr.mxu0 0.0
        %2092 = vmatpush1.msra.mxu0 0.0
        %2093 = vmatprep.subr.mxu0 0.0
        %2094 = vmatpush1.msra.mxu0 0.0
        %2095 = vmatprep.subr.mxu0 0.0
        %2096 = vmatpush1.msra.mxu0 0.0
        %2097 = vmatprep.subr.mxu0 0.0
        %2098 = vmatpush1.msra.mxu0 0.0
        %2099 = vmatprep.subr.mxu0 0.0
        %2100 = vmatpush1.msra.mxu0 0.0
        %2101 = vmatprep.subr.mxu0 0.0
        %2102 = vmatpush1.msra.mxu0 0.0
        %2103 = vmatprep.subr.mxu0 0.0
        %2104 = vmatpush1.msra.mxu0 0.0
        %2105 = vmatprep.subr.mxu0 0.0
        %2106 = vmatpush1.msra.mxu0 0.0
        %2107 = vmatprep.subr.mxu0 0.0
        %2108 = vmatpush1.msra.mxu0 0.0
        %2109 = vmatprep.subr.mxu0 0.0
        %2110 = vmatpush1.msra.mxu0 0.0
        %2111 = vmatprep.mubr.f32.mxu0 0.0
        %2112 = vmatmul.mubr.f32.gmra.mrb[0].mxu0 %v2045
        %v2113 = vpop.f32.mrb[0].mxu0
        %v2114 = vadd.f32 %v2026, %v2113
        %v2115 = vpop.f32.mrb[0].mxu0
        %v2116 = vadd.f32 %v2030, %v2115
        %2117 = vdwg.mxu0
        %2118 = vmatprep.subr.mxu0 %v2020
        %2119 = vmatpush1.msra.mxu0 %v2019
        %2120 = vmatprep.subr.mxu0 0.0
        %2121 = vmatpush1.msra.mxu0 0.0
        %2122 = vmatprep.subr.mxu0 0.0
        %2123 = vmatpush1.msra.mxu0 0.0
        %2124 = vmatprep.subr.mxu0 0.0
        %2125 = vmatpush1.msra.mxu0 0.0
        %2126 = vmatprep.subr.mxu0 0.0
        %2127 = vmatpush1.msra.mxu0 0.0
        %2128 = vmatprep.subr.mxu0 0.0
        %2129 = vmatpush1.msra.mxu0 0.0
        %2130 = vmatprep.subr.mxu0 0.0
        %2131 = vmatpush1.msra.mxu0 0.0
        %2132 = vmatprep.subr.mxu0 0.0
        %2133 = vmatpush1.msra.mxu0 0.0
        %2134 = vmatprep.subr.mxu0 0.0
        %2135 = vmatpush1.msra.mxu0 0.0
        %2136 = vmatprep.subr.mxu0 0.0
        %2137 = vmatpush1.msra.mxu0 0.0
        %2138 = vmatprep.subr.mxu0 0.0
        %2139 = vmatpush1.msra.mxu0 0.0
        %2140 = vmatprep.subr.mxu0 0.0
        %2141 = vmatpush1.msra.mxu0 0.0
        %2142 = vmatprep.subr.mxu0 0.0
        %2143 = vmatpush1.msra.mxu0 0.0
        %2144 = vmatprep.subr.mxu0 0.0
        %2145 = vmatpush1.msra.mxu0 0.0
        %2146 = vmatprep.subr.mxu0 0.0
        %2147 = vmatpush1.msra.mxu0 0.0
        %2148 = vmatprep.subr.mxu0 0.0
        %2149 = vmatpush1.msra.mxu0 0.0
        %2150 = vmatprep.subr.mxu0 0.0
        %2151 = vmatpush1.msra.mxu0 0.0
        %2152 = vmatprep.subr.mxu0 0.0
        %2153 = vmatpush1.msra.mxu0 0.0
        %2154 = vmatprep.subr.mxu0 0.0
        %2155 = vmatpush1.msra.mxu0 0.0
        %2156 = vmatprep.subr.mxu0 0.0
        %2157 = vmatpush1.msra.mxu0 0.0
        %2158 = vmatprep.subr.mxu0 0.0
        %2159 = vmatpush1.msra.mxu0 0.0
        %2160 = vmatprep.subr.mxu0 0.0
        %2161 = vmatpush1.msra.mxu0 0.0
        %2162 = vmatprep.subr.mxu0 0.0
        %2163 = vmatpush1.msra.mxu0 0.0
        %2164 = vmatprep.subr.mxu0 0.0
        %2165 = vmatpush1.msra.mxu0 0.0
        %2166 = vmatprep.subr.mxu0 0.0
        %2167 = vmatpush1.msra.mxu0 0.0
        %2168 = vmatprep.subr.mxu0 0.0
        %2169 = vmatpush1.msra.mxu0 0.0
        %2170 = vmatprep.subr.mxu0 0.0
        %2171 = vmatpush1.msra.mxu0 0.0
        %2172 = vmatprep.subr.mxu0 0.0
        %2173 = vmatpush1.msra.mxu0 0.0
        %2174 = vmatprep.subr.mxu0 0.0
        %2175 = vmatpush1.msra.mxu0 0.0
        %2176 = vmatprep.subr.mxu0 0.0
        %2177 = vmatpush1.msra.mxu0 0.0
        %2178 = vmatprep.subr.mxu0 0.0
        %2179 = vmatpush1.msra.mxu0 0.0
        %2180 = vmatprep.subr.mxu0 0.0
        %2181 = vmatpush1.msra.mxu0 0.0
        %2182 = vmatprep.mubr.f32.mxu0 0.0
        %2183 = vmatmul.mubr.f32.gmra.mrb[0].mxu0 %v2045
        %v2184 = vpop.f32.mrb[0].mxu0
        %v2185 = vadd.f32 %v2034, %v2184
        %v2186 = vpop.f32.mrb[0].mxu0
        %v2187 = vadd.f32 %v2038, %v2186
        %2188 = vdwg.mxu0
        %v2189 = vxor.u32 %v2114, 2147483648
        %v2190 = vxor.u32 %v2116, 2147483648
        %v2191 = vmul.f32 %v2189, 1.442695
        %v2192 = vpow.pop %v2191
        %v2193 = vmul.f32 %v2190, 1.442695
        %v2194 = vpow.pop %v2193
        %v2195 = vadd.f32 %v2192, 1.0
        %v2196 = vadd.f32 %v2194, 1.0
        %v2197 = vrcp.pop %v2195
        %v2198 = vmul.f32 1.0, %v2197
        %v2199 = vrcp.pop %v2196
        %v2200 = vmul.f32 1.0, %v2199
        %v2201 = vlaneseq
        %v2202 = vshrl.u32 %v2201, 7
        %v2203 = vsub.s32 0, %v2202
        %v2204 = vrot.slane %v2198, %v2203
        %v2205 = vlaneseq
        %v2206 = vshrl.u32 %v2205, 7
        %v2207 = vsub.s32 0, %v2206
        %v2208 = vrot.slane %v2200, %v2207
        %v2209 = vmul.f32 %v2204, %v1891
        %v2210 = vmul.f32 %v2208, %v1893
        %v2211 = vmul.f32 %v2204, %v1895
        %v2212 = vmul.f32 %v2208, %v1897
        %v2213 = vlaneseq
        %v2214 = vshrl.u32 %v2213, 7
        %v2215 = vsub.s32 0, %v2214
        %v2216 = vrot.slane %v2185, %v2215
        %v2217 = vlaneseq
        %v2218 = vshrl.u32 %v2217, 7
        %v2219 = vsub.s32 0, %v2218
        %v2220 = vrot.slane %v2187, %v2219
        %v2221 = vadd.f32 %v2209, %v2216
        %v2222 = vadd.f32 %v2210, %v2220
        %v2223 = vadd.f32 %v2211, %v2216
        %v2224 = vadd.f32 %v2212, %v2220
        %v2225 = vadd.f32 %v2221, %v356
        %v2226 = vadd.f32 %v2222, %v357
        %v2227 = vadd.f32 %v2223, %v358
        %v2228 = vadd.f32 %v2224, %v359
        %v2229 = vmax.f32 %v2225, 0.0
        %v2230 = vmax.f32 %v2226, 0.0
        %v2231 = vmax.f32 %v2227, 0.0
        %v2232 = vmax.f32 %v2228, 0.0
        %2233 = vst [vmem:[%s354] sm:$0xff] %v2229
        %2234 = vst [vmem:[%s354 + $0x8] sm:$0xff] %v2230
        %2235 = vst [vmem:[%s354 + $0x10] sm:$0xff] %v2231
        %2236 = vst [vmem:[%s354 + $0x18] sm:$0xff] %v2232
        %s2237 = smul.u32 2, %s21
        %p2238 = scmp.lt.s32.totalorder %s2237, 3
        %s2239 = scalar_select %p2238, %s2237, 3
        %s2240 = smul.addr %s2239, 2
        %s2241 = smul.addr %s2240, 8
        %s2242 = scalar_lea.vmem %s9, %s2241
        // Predicated region
        $region61: #{res_block_forward.1} parent=55 // pred_check
          %p2243 = pneg %p233
        $region62: #{res_block_forward.1} parent=55 // pred_check_branch
          %2245 = sbr.rel (%p2243) target = $region64
        $region63: #{res_block_forward.1} parent=55 // pred_region
          %s2246 = smul.u32 2, %s21
        $region64: #{res_block_forward.1} parent=55 // pred_fallthru
          _
      $region56: #{res_block_forward.1} parent=5 // pred_fallthru
        _
      %p2247 = scmp.le.s32.totalorder 2, %s16
      // Predicated region
      $region65: #{res_block_forward.1} parent=5 // pred_check
        %p2248 = pneg %p2247
      $region66: #{res_block_forward.1} parent=5 // pred_check_branch
        %2250 = sbr.rel (%p2248) target = $region68
      $region67: #{res_block_forward.1} parent=5 // pred_region
        %s2251 = ssub.s32 %s16, 2
        // Predicated region
        $region69: #{res_block_forward.1} parent=67 // pred_check
          %p2252 = pneg %p239
        $region70: #{res_block_forward.1} parent=67 // pred_check_branch
          %2254 = sbr.rel (%p2252) target = $region72
        $region71: #{res_block_forward.1} parent=67 // pred_region
          %s2255 = smul.u32 2, %s22
          %p2256 = scmp.lt.s32.totalorder %s2255, 3
          %s2257 = scalar_select %p2256, %s2255, 3
          %s2258 = smul.addr %s2257, 2
          %s2259 = smul.addr %s2258, 8
          %s2260 = scalar_lea.vmem %s9, %s2259
        $region72: #{res_block_forward.1} parent=67 // pred_fallthru
          _
      $region68: #{res_block_forward.1} parent=5 // pred_fallthru
        _
    $region6: #{res_block_forward.1} parent=1 // loop_footer
      %s20 = sadd.s32 1, %s16
    $region7: #{res_block_forward.1} parent=1 // loop_footer_branch
      %15 = sbr.rel target = $region3
    $region8: #{res_block_forward.1} parent=1 // loop_exit
      _
    %2261 = vsyncpa [#allocation3], 1
    %s2262 = scalar_lea.sflag [#allocation3], 1
    %2263 = vsyncpa %s2262, 1

</llo_original>
